<compile_context>
chip_gen: v7x
topology: tpu7x:2x2x1
jax: 0.10.0
libtpu: 0.0.40
codegen_flags: <defaults>
</compile_context>

<pallas_src>
import functools

import jax
import jax.numpy as jnp
from jax.experimental import pallas as pl
from jax.experimental.pallas import tpu as pltpu


def mha_kernel(x_ref, bias_ref, pqkv_ref, pout_ref, out_ref,
               *, B, S, E, H, D, scale):
    HD = H * D

    x2 = x_ref[...]                           # (B*S, E)
    bias = bias_ref[...]                      # (B, 1, S) additive key mask
    wqkv = pqkv_ref[0:E, :]                   # (E, 3*H*D)
    bqkv = pqkv_ref[E:E + 1, :]               # (1, 3*H*D)
    wo = pout_ref[0:HD, :]                    # (H*D, E)
    bo = pout_ref[HD:HD + 1, :]               # (1, E)

    # Fused Q/K/V projection: one lane-dense MXU matmul over all heads & batch.
    qkv = jnp.dot(x2, wqkv, preferred_element_type=jnp.float32) + bqkv   # (B*S, 3HD)
    qkv_b = qkv.reshape(B, S, 3 * HD)         # sublane-aligned split, free

    # Scaled dot-product attention: batched over B, static loop over heads.
    ctx_heads = []
    for h in range(H):
        q_h = qkv_b[:, :, h * D:(h + 1) * D]                   # (B, S, D)
        k_h = qkv_b[:, :, (H + h) * D:(H + h + 1) * D]         # (B, S, D)
        v_h = qkv_b[:, :, (2 * H + h) * D:(2 * H + h + 1) * D]  # (B, S, D)

        s_h = jnp.einsum('bqd,bkd->bqk', q_h, k_h,
                         preferred_element_type=jnp.float32) * scale + bias  # (B,S,S)
        m = jnp.max(s_h, axis=-1, keepdims=True)
        e = jnp.exp(s_h - m)
        z = jnp.sum(e, axis=-1, keepdims=True)
        p = e / z                               # exact normalization
        # TODO(synk): dropout on attention probs is identity (inference mode).
        ctx_heads.append(jnp.einsum('bqk,bkd->bqd', p, v_h,
                                    preferred_element_type=jnp.float32))

    ctx = jnp.concatenate(ctx_heads, axis=-1)   # (B, S, H*D)
    ctx2 = ctx.reshape(B * S, HD)               # sublane-aligned merge, free

    # Fused output projection + ReLU: one MXU matmul.
    out2 = jnp.dot(ctx2, wo, preferred_element_type=jnp.float32) + bo    # (B*S, E)
    out_ref[...] = jnp.maximum(out2, 0.0).astype(out_ref.dtype)


def mha_forward(x, mask, params, *, num_heads, head_dim):
    B, S, E = x.shape
    H, D = num_heads, head_dim
    HD = H * D
    scale = 1.0 / (D ** 0.5)

    wq, bq, wk, bk, wv, bv, wo, bo = params

    # Wrapper-side (free) packing: two contiguous parameter buffers.
    wqkv = jnp.concatenate([wq, wk, wv], axis=1)          # (E, 3*H*D)
    bqkv = jnp.concatenate([bq, bk, bv], axis=1)          # (1, 3*H*D)
    p_qkv = jnp.concatenate([wqkv, bqkv], axis=0)         # (E+1, 3*H*D)
    p_out = jnp.concatenate([wo, bo], axis=0)             # (H*D+1, E)

    x2 = x.reshape(B * S, E)
    # Additive key-dimension mask bias (0 keep / -1e9 masked).
    mask_bias = jnp.where(mask, 0.0, -1.0e9).astype(jnp.float32).reshape(B, 1, S)

    kernel = functools.partial(mha_kernel, B=B, S=S, E=E, H=H, D=D, scale=scale)

    def full_spec(shape):
        nd = len(shape)
        return pl.BlockSpec(shape, lambda i, _nd=nd: (0,) * _nd)

    out2 = pl.pallas_call(
        kernel,
        out_shape=jax.ShapeDtypeStruct((B * S, E), jnp.float32),
        grid=(1,),                               # single grid step; all in VMEM
        in_specs=[
            full_spec(x2.shape),
            full_spec(mask_bias.shape),
            full_spec(p_qkv.shape),
            full_spec(p_out.shape),
        ],
        out_specs=full_spec((B * S, E)),
        compiler_params=pltpu.CompilerParams(
            dimension_semantics=("arbitrary",)),
    )(x2, mask_bias, p_qkv, p_out)

    return out2.reshape(B, S, E)


def init_params(key, embed_dim, head_dim, num_heads):
    HD = head_dim * num_heads
    keys = jax.random.split(key, 8)

    def lin(kw, kb, fan_in, fan_out):
        bound = 1.0 / (fan_in ** 0.5)
        w = jax.random.uniform(kw, (fan_in, fan_out), jnp.float32, -bound, bound)
        b = jax.random.uniform(kb, (1, fan_out), jnp.float32, -bound, bound)
        return w, b

    wq, bq = lin(keys[0], keys[1], embed_dim, HD)
    wk, bk = lin(keys[2], keys[3], embed_dim, HD)
    wv, bv = lin(keys[4], keys[5], embed_dim, HD)
    wo, bo = lin(keys[6], keys[7], HD, embed_dim)
    return (wq, bq, wk, bk, wv, bv, wo, bo)


if __name__ == "__main__":
    embed_dim, head_dim, num_heads = 32, 8, 4
    B, S = 2, 8

    root = jax.random.PRNGKey(0)
    k_param, k_x, k_mask = jax.random.split(root, 3)

    params = init_params(k_param, embed_dim, head_dim, num_heads)
    x = jax.random.normal(k_x, (B, S, embed_dim), jnp.float32)
    # boolean mask over key positions (True = keep), as in the PyTorch module
    mask = jax.random.uniform(k_mask, (B, S)) > 0.3

    out = mha_forward(x, mask, params, num_heads=num_heads, head_dim=head_dim)
    out = jax.block_until_ready(out)

    assert out.shape == (B, S, embed_dim), out.shape
    print("KERNEL_OK")
</pallas_src>

<mosaic_0001>
module attributes {stable_mosaic.version = 11 : i64} {
  func.func @mha_kernel(%arg0: i32, %arg1: memref<16x32xf32, #tpu.memory_space<vmem>>, %arg2: memref<2x1x8xf32, #tpu.memory_space<vmem>>, %arg3: memref<33x96xf32, #tpu.memory_space<vmem>>, %arg4: memref<33x32xf32, #tpu.memory_space<vmem>>, %arg5: memref<16x32xf32, #tpu.memory_space<vmem>>) attributes {dimension_semantics = [#tpu.dimension_semantics<arbitrary>], iteration_bounds = array<i64: 1>, scalar_prefetch = 0 : i64, scratch_operands = 0 : i64, tpu.core_type = #tpu.core_type<tc>, window_params = [{pipeline_mode = #tpu.pipeline_mode<synchronous>, transform_indices = @transform_0, window_bounds = array<i64: 16, 32>}, {pipeline_mode = #tpu.pipeline_mode<synchronous>, transform_indices = @transform_1, window_bounds = array<i64: 2, 1, 8>}, {pipeline_mode = #tpu.pipeline_mode<synchronous>, transform_indices = @transform_2, window_bounds = array<i64: 33, 96>}, {pipeline_mode = #tpu.pipeline_mode<synchronous>, transform_indices = @transform_3, window_bounds = array<i64: 33, 32>}, {pipeline_mode = #tpu.pipeline_mode<synchronous>, transform_indices = @transform_4, window_bounds = array<i64: 16, 32>}]} {
    %c0 = arith.constant 0 : index
    %c0_0 = arith.constant 0 : index
    %0 = vector.load %arg1[%c0, %c0_0] : memref<16x32xf32, #tpu.memory_space<vmem>>, vector<16x32xf32>
    %c0_1 = arith.constant 0 : index
    %c0_2 = arith.constant 0 : index
    %c0_3 = arith.constant 0 : index
    %1 = vector.load %arg2[%c0_1, %c0_2, %c0_3] : memref<2x1x8xf32, #tpu.memory_space<vmem>>, vector<2x1x8xf32>
    %c0_4 = arith.constant 0 : index
    %c0_5 = arith.constant 0 : index
    %2 = vector.load %arg3[%c0_4, %c0_5] : memref<33x96xf32, #tpu.memory_space<vmem>>, vector<32x96xf32>
    %c32 = arith.constant 32 : index
    %c0_6 = arith.constant 0 : index
    %3 = vector.load %arg3[%c32, %c0_6] : memref<33x96xf32, #tpu.memory_space<vmem>>, vector<1x96xf32>
    %c0_7 = arith.constant 0 : index
    %c0_8 = arith.constant 0 : index
    %4 = vector.load %arg4[%c0_7, %c0_8] : memref<33x32xf32, #tpu.memory_space<vmem>>, vector<32x32xf32>
    %c32_9 = arith.constant 32 : index
    %c0_10 = arith.constant 0 : index
    %5 = vector.load %arg4[%c32_9, %c0_10] : memref<33x32xf32, #tpu.memory_space<vmem>>, vector<1x32xf32>
    %cst = arith.constant dense<0.000000e+00> : vector<16x96xf32>
    %6 = tpu.matmul %0, %2, %cst {dimension_numbers = #tpu.dot_dimension_numbers<[1], [0], [0], [1], [0, 0, 1, 1], [], []>} : vector<16x32xf32>, vector<32x96xf32>, vector<16x96xf32> -> vector<16x96xf32>
    %7 = vector.broadcast %3 : vector<1x96xf32> to vector<16x96xf32>
    %8 = arith.addf %6, %7 : vector<16x96xf32>
    %9 = vector.shape_cast %8 : vector<16x96xf32> to vector<2x8x96xf32>
    %10 = vector.extract_strided_slice %9 {offsets = [0, 0, 0], sizes = [2, 8, 8], strides = [1, 1, 1]} : vector<2x8x96xf32> to vector<2x8x8xf32>
    %11 = vector.extract_strided_slice %9 {offsets = [0, 0, 32], sizes = [2, 8, 8], strides = [1, 1, 1]} : vector<2x8x96xf32> to vector<2x8x8xf32>
    %12 = vector.extract_strided_slice %9 {offsets = [0, 0, 64], sizes = [2, 8, 8], strides = [1, 1, 1]} : vector<2x8x96xf32> to vector<2x8x8xf32>
    "tpu.trace_start"() <{level = 10 : i32, message = "bqd,bkd->bqk"}> : () -> ()
    %cst_11 = arith.constant dense<0.000000e+00> : vector<2x8x8xf32>
    %13 = tpu.matmul %10, %11, %cst_11 {dimension_numbers = #tpu.dot_dimension_numbers<[2], [2], [1], [1], [0, 0, 0, 1, 1, 1], [0], [0]>} : vector<2x8x8xf32>, vector<2x8x8xf32>, vector<2x8x8xf32> -> vector<2x8x8xf32>
    "tpu.trace_stop"() : () -> ()
    %cst_12 = arith.constant 0.353553385 : f32
    %14 = vector.broadcast %cst_12 : f32 to vector<2x8x8xf32>
    %15 = arith.mulf %13, %14 : vector<2x8x8xf32>
    %16 = vector.broadcast %1 : vector<2x1x8xf32> to vector<2x8x8xf32>
    %17 = arith.addf %15, %16 : vector<2x8x8xf32>
    %cst_13 = arith.constant dense<0xFF800000> : vector<2x8xf32>
    %18 = vector.multi_reduction <maximumf>, %17, %cst_13 [2] : vector<2x8x8xf32> to vector<2x8xf32>
    %19 = vector.shape_cast %18 : vector<2x8xf32> to vector<2x8x1xf32>
    %20 = vector.broadcast %19 : vector<2x8x1xf32> to vector<2x8x8xf32>
    %21 = arith.subf %17, %20 : vector<2x8x8xf32>
    %22 = math.exp %21 : vector<2x8x8xf32>
    %cst_14 = arith.constant dense<0.000000e+00> : vector<2x8xf32>
    %23 = vector.multi_reduction <add>, %22, %cst_14 [2] : vector<2x8x8xf32> to vector<2x8xf32>
    %24 = vector.shape_cast %23 : vector<2x8xf32> to vector<2x8x1xf32>
    %25 = vector.broadcast %24 : vector<2x8x1xf32> to vector<2x8x8xf32>
    %26 = arith.divf %22, %25 : vector<2x8x8xf32>
    "tpu.trace_start"() <{level = 10 : i32, message = "bqk,bkd->bqd"}> : () -> ()
    %cst_15 = arith.constant dense<0.000000e+00> : vector<2x8x8xf32>
    %27 = tpu.matmul %26, %12, %cst_15 {dimension_numbers = #tpu.dot_dimension_numbers<[2], [1], [1], [2], [0, 0, 0, 1, 1, 2], [0], [0]>} : vector<2x8x8xf32>, vector<2x8x8xf32>, vector<2x8x8xf32> -> vector<2x8x8xf32>
    "tpu.trace_stop"() : () -> ()
    %28 = vector.extract_strided_slice %9 {offsets = [0, 0, 8], sizes = [2, 8, 8], strides = [1, 1, 1]} : vector<2x8x96xf32> to vector<2x8x8xf32>
    %29 = vector.extract_strided_slice %9 {offsets = [0, 0, 40], sizes = [2, 8, 8], strides = [1, 1, 1]} : vector<2x8x96xf32> to vector<2x8x8xf32>
    %30 = vector.extract_strided_slice %9 {offsets = [0, 0, 72], sizes = [2, 8, 8], strides = [1, 1, 1]} : vector<2x8x96xf32> to vector<2x8x8xf32>
    "tpu.trace_start"() <{level = 10 : i32, message = "bqd,bkd->bqk"}> : () -> ()
    %cst_16 = arith.constant dense<0.000000e+00> : vector<2x8x8xf32>
    %31 = tpu.matmul %28, %29, %cst_16 {dimension_numbers = #tpu.dot_dimension_numbers<[2], [2], [1], [1], [0, 0, 0, 1, 1, 1], [0], [0]>} : vector<2x8x8xf32>, vector<2x8x8xf32>, vector<2x8x8xf32> -> vector<2x8x8xf32>
    "tpu.trace_stop"() : () -> ()
    %cst_17 = arith.constant 0.353553385 : f32
    %32 = vector.broadcast %cst_17 : f32 to vector<2x8x8xf32>
    %33 = arith.mulf %31, %32 : vector<2x8x8xf32>
    %34 = vector.broadcast %1 : vector<2x1x8xf32> to vector<2x8x8xf32>
    %35 = arith.addf %33, %34 : vector<2x8x8xf32>
    %cst_18 = arith.constant dense<0xFF800000> : vector<2x8xf32>
    %36 = vector.multi_reduction <maximumf>, %35, %cst_18 [2] : vector<2x8x8xf32> to vector<2x8xf32>
    %37 = vector.shape_cast %36 : vector<2x8xf32> to vector<2x8x1xf32>
    %38 = vector.broadcast %37 : vector<2x8x1xf32> to vector<2x8x8xf32>
    %39 = arith.subf %35, %38 : vector<2x8x8xf32>
    %40 = math.exp %39 : vector<2x8x8xf32>
    %cst_19 = arith.constant dense<0.000000e+00> : vector<2x8xf32>
    %41 = vector.multi_reduction <add>, %40, %cst_19 [2] : vector<2x8x8xf32> to vector<2x8xf32>
    %42 = vector.shape_cast %41 : vector<2x8xf32> to vector<2x8x1xf32>
    %43 = vector.broadcast %42 : vector<2x8x1xf32> to vector<2x8x8xf32>
    %44 = arith.divf %40, %43 : vector<2x8x8xf32>
    "tpu.trace_start"() <{level = 10 : i32, message = "bqk,bkd->bqd"}> : () -> ()
    %cst_20 = arith.constant dense<0.000000e+00> : vector<2x8x8xf32>
    %45 = tpu.matmul %44, %30, %cst_20 {dimension_numbers = #tpu.dot_dimension_numbers<[2], [1], [1], [2], [0, 0, 0, 1, 1, 2], [0], [0]>} : vector<2x8x8xf32>, vector<2x8x8xf32>, vector<2x8x8xf32> -> vector<2x8x8xf32>
    "tpu.trace_stop"() : () -> ()
    %46 = vector.extract_strided_slice %9 {offsets = [0, 0, 16], sizes = [2, 8, 8], strides = [1, 1, 1]} : vector<2x8x96xf32> to vector<2x8x8xf32>
    %47 = vector.extract_strided_slice %9 {offsets = [0, 0, 48], sizes = [2, 8, 8], strides = [1, 1, 1]} : vector<2x8x96xf32> to vector<2x8x8xf32>
    %48 = vector.extract_strided_slice %9 {offsets = [0, 0, 80], sizes = [2, 8, 8], strides = [1, 1, 1]} : vector<2x8x96xf32> to vector<2x8x8xf32>
    "tpu.trace_start"() <{level = 10 : i32, message = "bqd,bkd->bqk"}> : () -> ()
    %cst_21 = arith.constant dense<0.000000e+00> : vector<2x8x8xf32>
    %49 = tpu.matmul %46, %47, %cst_21 {dimension_numbers = #tpu.dot_dimension_numbers<[2], [2], [1], [1], [0, 0, 0, 1, 1, 1], [0], [0]>} : vector<2x8x8xf32>, vector<2x8x8xf32>, vector<2x8x8xf32> -> vector<2x8x8xf32>
    "tpu.trace_stop"() : () -> ()
    %cst_22 = arith.constant 0.353553385 : f32
    %50 = vector.broadcast %cst_22 : f32 to vector<2x8x8xf32>
    %51 = arith.mulf %49, %50 : vector<2x8x8xf32>
    %52 = vector.broadcast %1 : vector<2x1x8xf32> to vector<2x8x8xf32>
    %53 = arith.addf %51, %52 : vector<2x8x8xf32>
    %cst_23 = arith.constant dense<0xFF800000> : vector<2x8xf32>
    %54 = vector.multi_reduction <maximumf>, %53, %cst_23 [2] : vector<2x8x8xf32> to vector<2x8xf32>
    %55 = vector.shape_cast %54 : vector<2x8xf32> to vector<2x8x1xf32>
    %56 = vector.broadcast %55 : vector<2x8x1xf32> to vector<2x8x8xf32>
    %57 = arith.subf %53, %56 : vector<2x8x8xf32>
    %58 = math.exp %57 : vector<2x8x8xf32>
    %cst_24 = arith.constant dense<0.000000e+00> : vector<2x8xf32>
    %59 = vector.multi_reduction <add>, %58, %cst_24 [2] : vector<2x8x8xf32> to vector<2x8xf32>
    %60 = vector.shape_cast %59 : vector<2x8xf32> to vector<2x8x1xf32>
    %61 = vector.broadcast %60 : vector<2x8x1xf32> to vector<2x8x8xf32>
    %62 = arith.divf %58, %61 : vector<2x8x8xf32>
    "tpu.trace_start"() <{level = 10 : i32, message = "bqk,bkd->bqd"}> : () -> ()
    %cst_25 = arith.constant dense<0.000000e+00> : vector<2x8x8xf32>
    %63 = tpu.matmul %62, %48, %cst_25 {dimension_numbers = #tpu.dot_dimension_numbers<[2], [1], [1], [2], [0, 0, 0, 1, 1, 2], [0], [0]>} : vector<2x8x8xf32>, vector<2x8x8xf32>, vector<2x8x8xf32> -> vector<2x8x8xf32>
    "tpu.trace_stop"() : () -> ()
    %64 = vector.extract_strided_slice %9 {offsets = [0, 0, 24], sizes = [2, 8, 8], strides = [1, 1, 1]} : vector<2x8x96xf32> to vector<2x8x8xf32>
    %65 = vector.extract_strided_slice %9 {offsets = [0, 0, 56], sizes = [2, 8, 8], strides = [1, 1, 1]} : vector<2x8x96xf32> to vector<2x8x8xf32>
    %66 = vector.extract_strided_slice %9 {offsets = [0, 0, 88], sizes = [2, 8, 8], strides = [1, 1, 1]} : vector<2x8x96xf32> to vector<2x8x8xf32>
    "tpu.trace_start"() <{level = 10 : i32, message = "bqd,bkd->bqk"}> : () -> ()
    %cst_26 = arith.constant dense<0.000000e+00> : vector<2x8x8xf32>
    %67 = tpu.matmul %64, %65, %cst_26 {dimension_numbers = #tpu.dot_dimension_numbers<[2], [2], [1], [1], [0, 0, 0, 1, 1, 1], [0], [0]>} : vector<2x8x8xf32>, vector<2x8x8xf32>, vector<2x8x8xf32> -> vector<2x8x8xf32>
    "tpu.trace_stop"() : () -> ()
    %cst_27 = arith.constant 0.353553385 : f32
    %68 = vector.broadcast %cst_27 : f32 to vector<2x8x8xf32>
    %69 = arith.mulf %67, %68 : vector<2x8x8xf32>
    %70 = vector.broadcast %1 : vector<2x1x8xf32> to vector<2x8x8xf32>
    %71 = arith.addf %69, %70 : vector<2x8x8xf32>
    %cst_28 = arith.constant dense<0xFF800000> : vector<2x8xf32>
    %72 = vector.multi_reduction <maximumf>, %71, %cst_28 [2] : vector<2x8x8xf32> to vector<2x8xf32>
    %73 = vector.shape_cast %72 : vector<2x8xf32> to vector<2x8x1xf32>
    %74 = vector.broadcast %73 : vector<2x8x1xf32> to vector<2x8x8xf32>
    %75 = arith.subf %71, %74 : vector<2x8x8xf32>
    %76 = math.exp %75 : vector<2x8x8xf32>
    %cst_29 = arith.constant dense<0.000000e+00> : vector<2x8xf32>
    %77 = vector.multi_reduction <add>, %76, %cst_29 [2] : vector<2x8x8xf32> to vector<2x8xf32>
    %78 = vector.shape_cast %77 : vector<2x8xf32> to vector<2x8x1xf32>
    %79 = vector.broadcast %78 : vector<2x8x1xf32> to vector<2x8x8xf32>
    %80 = arith.divf %76, %79 : vector<2x8x8xf32>
    "tpu.trace_start"() <{level = 10 : i32, message = "bqk,bkd->bqd"}> : () -> ()
    %cst_30 = arith.constant dense<0.000000e+00> : vector<2x8x8xf32>
    %81 = tpu.matmul %80, %66, %cst_30 {dimension_numbers = #tpu.dot_dimension_numbers<[2], [1], [1], [2], [0, 0, 0, 1, 1, 2], [0], [0]>} : vector<2x8x8xf32>, vector<2x8x8xf32>, vector<2x8x8xf32> -> vector<2x8x8xf32>
    "tpu.trace_stop"() : () -> ()
    %82 = tpu.concatenate %27, %45, %63, %81 in 2 : vector<2x8x8xf32>, vector<2x8x8xf32>, vector<2x8x8xf32>, vector<2x8x8xf32> -> vector<2x8x32xf32>
    %83 = vector.shape_cast %82 : vector<2x8x32xf32> to vector<16x32xf32>
    %cst_31 = arith.constant dense<0.000000e+00> : vector<16x32xf32>
    %84 = tpu.matmul %83, %4, %cst_31 {dimension_numbers = #tpu.dot_dimension_numbers<[1], [0], [0], [1], [0, 0, 1, 1], [], []>} : vector<16x32xf32>, vector<32x32xf32>, vector<16x32xf32> -> vector<16x32xf32>
    %85 = vector.broadcast %5 : vector<1x32xf32> to vector<16x32xf32>
    %86 = arith.addf %84, %85 : vector<16x32xf32>
    %cst_32 = arith.constant 0.000000e+00 : f32
    %87 = vector.broadcast %cst_32 : f32 to vector<16x32xf32>
    %88 = arith.maximumf %86, %87 : vector<16x32xf32>
    %c0_33 = arith.constant 0 : index
    %c0_34 = arith.constant 0 : index
    %89 = vector.load %arg5[%c0_33, %c0_34] : memref<16x32xf32, #tpu.memory_space<vmem>>, vector<16x32xf32>
    tpu.vector_store %arg5[%c0_33, %c0_34], %88 {strides = array<i32>} : memref<16x32xf32, #tpu.memory_space<vmem>>, vector<16x32xf32>,
    return
  }
  func.func @transform_0(%arg0: i32) -> (i32, i32) {
    %c0_i32 = arith.constant 0 : i32
    %c0_i32_0 = arith.constant 0 : i32
    %c0_i32_1 = arith.constant 0 : i32
    return %c0_i32, %c0_i32_0 : i32, i32
  }
  func.func @transform_1(%arg0: i32) -> (i32, i32, i32) {
    %c0_i32 = arith.constant 0 : i32
    %c0_i32_0 = arith.constant 0 : i32
    %c0_i32_1 = arith.constant 0 : i32
    %c0_i32_2 = arith.constant 0 : i32
    return %c0_i32, %c0_i32_0, %c0_i32_1 : i32, i32, i32
  }
  func.func @transform_2(%arg0: i32) -> (i32, i32) {
    %c0_i32 = arith.constant 0 : i32
    %c0_i32_0 = arith.constant 0 : i32
    %c0_i32_1 = arith.constant 0 : i32
    return %c0_i32, %c0_i32_0 : i32, i32
  }
  func.func @transform_3(%arg0: i32) -> (i32, i32) {
    %c0_i32 = arith.constant 0 : i32
    %c0_i32_0 = arith.constant 0 : i32
    %c0_i32_1 = arith.constant 0 : i32
    return %c0_i32, %c0_i32_0 : i32, i32
  }
  func.func @transform_4(%arg0: i32) -> (i32, i32) {
    %c0_i32 = arith.constant 0 : i32
    %c0_i32_0 = arith.constant 0 : i32
    %c0_i32_1 = arith.constant 0 : i32
    return %c0_i32, %c0_i32_0 : i32, i32
  }
}

</mosaic_0001>

<llo_original>
// kernel: tpu_custom_call.1
$region0: #{tpu_custom_call.1}
  #allocation0 [shape = 'u32[]', space=smem, size = 0x4, offset = 0x4, fixed_abs, tag = 'smem constant byte address 0x4 - core index']
  #allocation1 [shape = 'u32[144,128]{1,0:T(1,128)}', space=vmem, size = 0x12000, scoped, tag = 'internal scratch']
  %s0 = inlined_call_operand.vmem [shape: f32[16,32], index: 0, kind: input, shape index: {}]
  %s1 = inlined_call_operand.vmem [shape: f32[2,1,8], index: 1, kind: input, shape index: {}]
  %s2 = inlined_call_operand.vmem [shape: f32[33,96], index: 2, kind: input, shape index: {}]
  %s3 = inlined_call_operand.vmem [shape: f32[33,32], index: 3, kind: input, shape index: {}]
  %s4 = inlined_call_operand.hbm [shape: f32[16,32], index: 4, kind: output, shape index: {}]
  %s5 = sld [smem:[#allocation0]]
  $region26: #{tpu_custom_call.1} parent=0
    _
  %s7 = ssub.s32 1, %s5
  %s8 = scalar_select 0, %s7, %s5
  $region1: #{tpu_custom_call.1} parent=0
    #allocation2 [shape = 'u8[8192]{0}', space=vmem, size = 0x2000, scoped, tag = 'output window, operand 0, single buffered']
    #allocation3 [shape = 's32[1]{0}', space=sflag, size = 0x4, scoped, tag = 'scoped memory for tpu_custom_call.1']
    %9 = vsyncpa [#allocation3], 0
    // Predicated region
    $region2: #{tpu_custom_call.1} parent=1 // pred_check
      _
    $region3: #{tpu_custom_call.1} parent=1 // pred_check_branch
      %11 = sbr.rel (0) target = $region5
    $region4: #{tpu_custom_call.1} parent=1 // pred_region
      _
    $region5: #{tpu_custom_call.1} parent=1 // pred_fallthru
      _
    // Predicated region
    $region6: #{tpu_custom_call.1} parent=1 // pred_check
      _
    $region7: #{tpu_custom_call.1} parent=1 // pred_check_branch
      %13 = sbr.rel (0) target = $region9
    $region8: #{tpu_custom_call.1} parent=1 // pred_region
      _
    $region9: #{tpu_custom_call.1} parent=1 // pred_fallthru
      _
    // Predicated region
    $region10: #{tpu_custom_call.1} parent=1 // pred_check
      _
    $region11: #{tpu_custom_call.1} parent=1 // pred_check_branch
      %15 = sbr.rel (0) target = $region13
    $region12: #{tpu_custom_call.1} parent=1 // pred_region
      _
    $region13: #{tpu_custom_call.1} parent=1 // pred_fallthru
      _
    // Predicated region
    $region14: #{tpu_custom_call.1} parent=1 // pred_check
      _
    $region15: #{tpu_custom_call.1} parent=1 // pred_check_branch
      %17 = sbr.rel (0) target = $region17
    $region16: #{tpu_custom_call.1} parent=1 // pred_region
      _
    $region17: #{tpu_custom_call.1} parent=1 // pred_fallthru
      _
    %v18 = vld [vmem:[%s0] sm:$0xff]
    %v19 = vld [vmem:[%s0 + $0x8] sm:$0xff]
    %v20 = vld [vmem:[%s1] sm:$0x1]
    %v21 = vld [vmem:[%s1 + $0x1] sm:$0x1]
    %v22 = vld [vmem:[%s2] sm:$0xff]
    %v23 = vld [vmem:[%s2 + $0x8] sm:$0xff]
    %v24 = vld [vmem:[%s2 + $0x10] sm:$0xff]
    %v25 = vld [vmem:[%s2 + $0x18] sm:$0xff]
    %v26 = vld [vmem:[%s2 + $0x20] sm:$0x1]
    %v27 = vld [vmem:[%s3] sm:$0xff]
    %v28 = vld [vmem:[%s3 + $0x8] sm:$0xff]
    %v29 = vld [vmem:[%s3 + $0x10] sm:$0xff]
    %v30 = vld [vmem:[%s3 + $0x18] sm:$0xff]
    %v31 = vld [vmem:[%s3 + $0x20] sm:$0x1]
    %v32 = vlaneseq
    %v33 = vshrl.u32 %v32, 7
    %v34 = vsub.s32 0, %v33
    %v35 = vrot.slane %v26, %v34
    %vm36 = vcmask 261120
    %v38 = vsel %vm36, %v18, 0
    %v41 = vsel %vm36, %v19, 0
    %43 = vmatprep.subr.mxu0 0.0
    %44 = vmatpush1.msra.mxu0 %v22
    %45 = vmatprep.subr.mxu0 0.0
    %46 = vmatpush1.msra.mxu0 %v23
    %47 = vmatprep.subr.mxu0 0.0
    %48 = vmatpush1.msra.mxu0 %v24
    %49 = vmatprep.subr.mxu0 0.0
    %50 = vmatpush1.msra.mxu0 %v25
    %51 = vmatprep.subr.mxu0 0.0
    %52 = vmatpush1.msra.mxu0 0.0
    %53 = vmatprep.subr.mxu0 0.0
    %54 = vmatpush1.msra.mxu0 0.0
    %55 = vmatprep.subr.mxu0 0.0
    %56 = vmatpush1.msra.mxu0 0.0
    %57 = vmatprep.subr.mxu0 0.0
    %58 = vmatpush1.msra.mxu0 0.0
    %59 = vmatprep.subr.mxu0 0.0
    %60 = vmatpush1.msra.mxu0 0.0
    %61 = vmatprep.subr.mxu0 0.0
    %62 = vmatpush1.msra.mxu0 0.0
    %63 = vmatprep.subr.mxu0 0.0
    %64 = vmatpush1.msra.mxu0 0.0
    %65 = vmatprep.subr.mxu0 0.0
    %66 = vmatpush1.msra.mxu0 0.0
    %67 = vmatprep.subr.mxu0 0.0
    %68 = vmatpush1.msra.mxu0 0.0
    %69 = vmatprep.subr.mxu0 0.0
    %70 = vmatpush1.msra.mxu0 0.0
    %71 = vmatprep.subr.mxu0 0.0
    %72 = vmatpush1.msra.mxu0 0.0
    %73 = vmatprep.subr.mxu0 0.0
    %74 = vmatpush1.msra.mxu0 0.0
    %75 = vmatprep.subr.mxu0 0.0
    %76 = vmatpush1.msra.mxu0 0.0
    %77 = vmatprep.subr.mxu0 0.0
    %78 = vmatpush1.msra.mxu0 0.0
    %79 = vmatprep.subr.mxu0 0.0
    %80 = vmatpush1.msra.mxu0 0.0
    %81 = vmatprep.subr.mxu0 0.0
    %82 = vmatpush1.msra.mxu0 0.0
    %83 = vmatprep.subr.mxu0 0.0
    %84 = vmatpush1.msra.mxu0 0.0
    %85 = vmatprep.subr.mxu0 0.0
    %86 = vmatpush1.msra.mxu0 0.0
    %87 = vmatprep.subr.mxu0 0.0
    %88 = vmatpush1.msra.mxu0 0.0
    %89 = vmatprep.subr.mxu0 0.0
    %90 = vmatpush1.msra.mxu0 0.0
    %91 = vmatprep.subr.mxu0 0.0
    %92 = vmatpush1.msra.mxu0 0.0
    %93 = vmatprep.subr.mxu0 0.0
    %94 = vmatpush1.msra.mxu0 0.0
    %95 = vmatprep.subr.mxu0 0.0
    %96 = vmatpush1.msra.mxu0 0.0
    %97 = vmatprep.subr.mxu0 0.0
    %98 = vmatpush1.msra.mxu0 0.0
    %99 = vmatprep.subr.mxu0 0.0
    %100 = vmatpush1.msra.mxu0 0.0
    %101 = vmatprep.subr.mxu0 0.0
    %102 = vmatpush1.msra.mxu0 0.0
    %103 = vmatprep.subr.mxu0 0.0
    %104 = vmatpush1.msra.mxu0 0.0
    %105 = vmatprep.subr.mxu0 0.0
    %106 = vmatpush1.msra.mxu0 0.0
    %107 = vmatprep.mubr.f32.mxu0 0.0
    %108 = vmatmul.mubr.f32.gmra.mrb[0].mxu0 %v38
    %v109 = vpop.f32.mrb[0].mxu0
    %v110 = vadd.f32 %v35, %v109
    %v111 = vpop.f32.mrb[0].mxu0
    %112 = vmatprep.mubr.f32.mxu0 0.0
    %113 = vmatmul.mubr.f32.gmra.mrb[0].mxu0 %v41
    %v114 = vpop.f32.mrb[0].mxu0
    %v115 = vadd.f32 %v35, %v114
    %v116 = vpop.f32.mrb[0].mxu0
    %117 = vdwg.mxu0
    %119 = vrot.lane.b32.xlu0 %v110, 96
    %v120 = vpop.permute.xlu0 %119
    %vm121 = vcmask 64512
    %v122 = vsel %vm121, %v110, 0
    %v124 = vsel %vm121, %v120, 0
    %126 = vmatprep.subr.mxu0 0.0
    %127 = vmatpush1.xpose.msra.mxu0 %v124
    %128 = vmatprep.subr.mxu0 0.0
    %129 = vmatpush1.xpose.msra.mxu0 0.0
    %130 = vmatprep.subr.mxu0 0.0
    %131 = vmatpush1.xpose.msra.mxu0 0.0
    %132 = vmatprep.subr.mxu0 0.0
    %133 = vmatpush1.xpose.msra.mxu0 0.0
    %134 = vmatprep.subr.mxu0 0.0
    %135 = vmatpush1.xpose.msra.mxu0 0.0
    %136 = vmatprep.subr.mxu0 0.0
    %137 = vmatpush1.xpose.msra.mxu0 0.0
    %138 = vmatprep.subr.mxu0 0.0
    %139 = vmatpush1.xpose.msra.mxu0 0.0
    %140 = vmatprep.subr.mxu0 0.0
    %141 = vmatpush1.xpose.msra.mxu0 0.0
    %142 = vmatprep.subr.mxu0 0.0
    %143 = vmatpush1.xpose.msra.mxu0 0.0
    %144 = vmatprep.subr.mxu0 0.0
    %145 = vmatpush1.xpose.msra.mxu0 0.0
    %146 = vmatprep.subr.mxu0 0.0
    %147 = vmatpush1.xpose.msra.mxu0 0.0
    %148 = vmatprep.subr.mxu0 0.0
    %149 = vmatpush1.xpose.msra.mxu0 0.0
    %150 = vmatprep.subr.mxu0 0.0
    %151 = vmatpush1.xpose.msra.mxu0 0.0
    %152 = vmatprep.subr.mxu0 0.0
    %153 = vmatpush1.xpose.msra.mxu0 0.0
    %154 = vmatprep.subr.mxu0 0.0
    %155 = vmatpush1.xpose.msra.mxu0 0.0
    %156 = vmatprep.subr.mxu0 0.0
    %157 = vmatpush1.xpose.msra.mxu0 0.0
    %158 = vmatprep.subr.mxu0 0.0
    %159 = vmatpush1.xpose.msra.mxu0 0.0
    %160 = vmatprep.subr.mxu0 0.0
    %161 = vmatpush1.xpose.msra.mxu0 0.0
    %162 = vmatprep.subr.mxu0 0.0
    %163 = vmatpush1.xpose.msra.mxu0 0.0
    %164 = vmatprep.subr.mxu0 0.0
    %165 = vmatpush1.xpose.msra.mxu0 0.0
    %166 = vmatprep.subr.mxu0 0.0
    %167 = vmatpush1.xpose.msra.mxu0 0.0
    %168 = vmatprep.subr.mxu0 0.0
    %169 = vmatpush1.xpose.msra.mxu0 0.0
    %170 = vmatprep.subr.mxu0 0.0
    %171 = vmatpush1.xpose.msra.mxu0 0.0
    %172 = vmatprep.subr.mxu0 0.0
    %173 = vmatpush1.xpose.msra.mxu0 0.0
    %174 = vmatprep.subr.mxu0 0.0
    %175 = vmatpush1.xpose.msra.mxu0 0.0
    %176 = vmatprep.subr.mxu0 0.0
    %177 = vmatpush1.xpose.msra.mxu0 0.0
    %178 = vmatprep.subr.mxu0 0.0
    %179 = vmatpush1.xpose.msra.mxu0 0.0
    %180 = vmatprep.subr.mxu0 0.0
    %181 = vmatpush1.xpose.msra.mxu0 0.0
    %182 = vmatprep.subr.mxu0 0.0
    %183 = vmatpush1.xpose.msra.mxu0 0.0
    %184 = vmatprep.subr.mxu0 0.0
    %185 = vmatpush1.xpose.msra.mxu0 0.0
    %186 = vmatprep.subr.mxu0 0.0
    %187 = vmatpush1.xpose.msra.mxu0 0.0
    %188 = vmatprep.subr.mxu0 0.0
    %189 = vmatpush1.xpose.msra.mxu0 0.0
    %190 = vmatprep.mubr.f32.mxu0 0.0
    %191 = vmatmul.mubr.f32.gmra.mrb[0].mxu0 %v122
    %v192 = vpop.f32.mrb[0].mxu0
    %v193 = vadd.f32 0.0, %v192
    %v194 = vpop.f32.mrb[0].mxu0
    %195 = vdwg.mxu0
    %197 = vrot.lane.b32.xlu0 %v115, 96
    %v198 = vpop.permute.xlu0 %197
    %v199 = vsel %vm121, %v115, 0
    %v201 = vsel %vm121, %v198, 0
    %203 = vmatprep.subr.mxu0 0.0
    %204 = vmatpush1.xpose.msra.mxu0 %v201
    %205 = vmatprep.subr.mxu0 0.0
    %206 = vmatpush1.xpose.msra.mxu0 0.0
    %207 = vmatprep.subr.mxu0 0.0
    %208 = vmatpush1.xpose.msra.mxu0 0.0
    %209 = vmatprep.subr.mxu0 0.0
    %210 = vmatpush1.xpose.msra.mxu0 0.0
    %211 = vmatprep.subr.mxu0 0.0
    %212 = vmatpush1.xpose.msra.mxu0 0.0
    %213 = vmatprep.subr.mxu0 0.0
    %214 = vmatpush1.xpose.msra.mxu0 0.0
    %215 = vmatprep.subr.mxu0 0.0
    %216 = vmatpush1.xpose.msra.mxu0 0.0
    %217 = vmatprep.subr.mxu0 0.0
    %218 = vmatpush1.xpose.msra.mxu0 0.0
    %219 = vmatprep.subr.mxu0 0.0
    %220 = vmatpush1.xpose.msra.mxu0 0.0
    %221 = vmatprep.subr.mxu0 0.0
    %222 = vmatpush1.xpose.msra.mxu0 0.0
    %223 = vmatprep.subr.mxu0 0.0
    %224 = vmatpush1.xpose.msra.mxu0 0.0
    %225 = vmatprep.subr.mxu0 0.0
    %226 = vmatpush1.xpose.msra.mxu0 0.0
    %227 = vmatprep.subr.mxu0 0.0
    %228 = vmatpush1.xpose.msra.mxu0 0.0
    %229 = vmatprep.subr.mxu0 0.0
    %230 = vmatpush1.xpose.msra.mxu0 0.0
    %231 = vmatprep.subr.mxu0 0.0
    %232 = vmatpush1.xpose.msra.mxu0 0.0
    %233 = vmatprep.subr.mxu0 0.0
    %234 = vmatpush1.xpose.msra.mxu0 0.0
    %235 = vmatprep.subr.mxu0 0.0
    %236 = vmatpush1.xpose.msra.mxu0 0.0
    %237 = vmatprep.subr.mxu0 0.0
    %238 = vmatpush1.xpose.msra.mxu0 0.0
    %239 = vmatprep.subr.mxu0 0.0
    %240 = vmatpush1.xpose.msra.mxu0 0.0
    %241 = vmatprep.subr.mxu0 0.0
    %242 = vmatpush1.xpose.msra.mxu0 0.0
    %243 = vmatprep.subr.mxu0 0.0
    %244 = vmatpush1.xpose.msra.mxu0 0.0
    %245 = vmatprep.subr.mxu0 0.0
    %246 = vmatpush1.xpose.msra.mxu0 0.0
    %247 = vmatprep.subr.mxu0 0.0
    %248 = vmatpush1.xpose.msra.mxu0 0.0
    %249 = vmatprep.subr.mxu0 0.0
    %250 = vmatpush1.xpose.msra.mxu0 0.0
    %251 = vmatprep.subr.mxu0 0.0
    %252 = vmatpush1.xpose.msra.mxu0 0.0
    %253 = vmatprep.subr.mxu0 0.0
    %254 = vmatpush1.xpose.msra.mxu0 0.0
    %255 = vmatprep.subr.mxu0 0.0
    %256 = vmatpush1.xpose.msra.mxu0 0.0
    %257 = vmatprep.subr.mxu0 0.0
    %258 = vmatpush1.xpose.msra.mxu0 0.0
    %259 = vmatprep.subr.mxu0 0.0
    %260 = vmatpush1.xpose.msra.mxu0 0.0
    %261 = vmatprep.subr.mxu0 0.0
    %262 = vmatpush1.xpose.msra.mxu0 0.0
    %263 = vmatprep.subr.mxu0 0.0
    %264 = vmatpush1.xpose.msra.mxu0 0.0
    %265 = vmatprep.subr.mxu0 0.0
    %266 = vmatpush1.xpose.msra.mxu0 0.0
    %267 = vmatprep.mubr.f32.mxu0 0.0
    %268 = vmatmul.mubr.f32.gmra.mrb[0].mxu0 %v199
    %v269 = vpop.f32.mrb[0].mxu0
    %v270 = vadd.f32 0.0, %v269
    %v271 = vpop.f32.mrb[0].mxu0
    %272 = vdwg.mxu0
    %v273 = vmul.f32 %v193, 0.35355338
    %v274 = vmul.f32 %v270, 0.35355338
    %v277 = vlaneseq
    %v278 = vshrl.u32 %v277, 7
    %v279 = vsub.s32 0, %v278
    %v280 = vrot.slane %v20, %v279
    %v281 = vlaneseq
    %v282 = vshrl.u32 %v281, 7
    %v283 = vsub.s32 0, %v282
    %v284 = vrot.slane %v21, %v283
    %v287 = vadd.f32 %v273, %v280
    %v288 = vadd.f32 %v274, %v284
    %v289 = vsel %vm121, %v287, -inf
    %290 = vmax.xlane.f32.xlu0 %v289
    %v291 = vpop.xlane.xlu0 %290
    %v292 = vsel %vm121, %v288, -inf
    %293 = vmax.xlane.f32.xlu0 %v292
    %v294 = vpop.xlane.xlu0 %293
    %v295 = vsub.f32 %v287, %v291
    %v296 = vsub.f32 %v288, %v294
    %v297 = vmul.f32 %v295, 1.442695
    %v298 = vpow.pop %v297
    %v299 = vmul.f32 %v296, 1.442695
    %v300 = vpow.pop %v299
    %v301 = vsel %vm121, %v298, 0.0
    %302 = vadd.xlane.f32.xlu0 %v301
    %v303 = vpop.xlane.xlu0 %302
    %v304 = vsel %vm121, %v300, 0.0
    %305 = vadd.xlane.f32.xlu0 %v304
    %v306 = vpop.xlane.xlu0 %305
    %v307 = vrcp.pop %v303
    %v308 = vmul.f32 %v298, %v307
    %v309 = vrcp.pop %v306
    %v310 = vmul.f32 %v300, %v309
    %311 = vrot.lane.b32.xlu0 %v110, 64
    %v312 = vpop.permute.xlu0 %311
    %v315 = vsel %vm121, %v308, 0
    %317 = vmatprep.subr.mxu0 0.0
    %318 = vmatpush1.msra.mxu0 %v312
    %319 = vmatprep.subr.mxu0 0.0
    %320 = vmatpush1.msra.mxu0 0.0
    %321 = vmatprep.subr.mxu0 0.0
    %322 = vmatpush1.msra.mxu0 0.0
    %323 = vmatprep.subr.mxu0 0.0
    %324 = vmatpush1.msra.mxu0 0.0
    %325 = vmatprep.subr.mxu0 0.0
    %326 = vmatpush1.msra.mxu0 0.0
    %327 = vmatprep.subr.mxu0 0.0
    %328 = vmatpush1.msra.mxu0 0.0
    %329 = vmatprep.subr.mxu0 0.0
    %330 = vmatpush1.msra.mxu0 0.0
    %331 = vmatprep.subr.mxu0 0.0
    %332 = vmatpush1.msra.mxu0 0.0
    %333 = vmatprep.subr.mxu0 0.0
    %334 = vmatpush1.msra.mxu0 0.0
    %335 = vmatprep.subr.mxu0 0.0
    %336 = vmatpush1.msra.mxu0 0.0
    %337 = vmatprep.subr.mxu0 0.0
    %338 = vmatpush1.msra.mxu0 0.0
    %339 = vmatprep.subr.mxu0 0.0
    %340 = vmatpush1.msra.mxu0 0.0
    %341 = vmatprep.subr.mxu0 0.0
    %342 = vmatpush1.msra.mxu0 0.0
    %343 = vmatprep.subr.mxu0 0.0
    %344 = vmatpush1.msra.mxu0 0.0
    %345 = vmatprep.subr.mxu0 0.0
    %346 = vmatpush1.msra.mxu0 0.0
    %347 = vmatprep.subr.mxu0 0.0
    %348 = vmatpush1.msra.mxu0 0.0
    %349 = vmatprep.subr.mxu0 0.0
    %350 = vmatpush1.msra.mxu0 0.0
    %351 = vmatprep.subr.mxu0 0.0
    %352 = vmatpush1.msra.mxu0 0.0
    %353 = vmatprep.subr.mxu0 0.0
    %354 = vmatpush1.msra.mxu0 0.0
    %355 = vmatprep.subr.mxu0 0.0
    %356 = vmatpush1.msra.mxu0 0.0
    %357 = vmatprep.subr.mxu0 0.0
    %358 = vmatpush1.msra.mxu0 0.0
    %359 = vmatprep.subr.mxu0 0.0
    %360 = vmatpush1.msra.mxu0 0.0
    %361 = vmatprep.subr.mxu0 0.0
    %362 = vmatpush1.msra.mxu0 0.0
    %363 = vmatprep.subr.mxu0 0.0
    %364 = vmatpush1.msra.mxu0 0.0
    %365 = vmatprep.subr.mxu0 0.0
    %366 = vmatpush1.msra.mxu0 0.0
    %367 = vmatprep.subr.mxu0 0.0
    %368 = vmatpush1.msra.mxu0 0.0
    %369 = vmatprep.subr.mxu0 0.0
    %370 = vmatpush1.msra.mxu0 0.0
    %371 = vmatprep.subr.mxu0 0.0
    %372 = vmatpush1.msra.mxu0 0.0
    %373 = vmatprep.subr.mxu0 0.0
    %374 = vmatpush1.msra.mxu0 0.0
    %375 = vmatprep.subr.mxu0 0.0
    %376 = vmatpush1.msra.mxu0 0.0
    %377 = vmatprep.subr.mxu0 0.0
    %378 = vmatpush1.msra.mxu0 0.0
    %379 = vmatprep.subr.mxu0 0.0
    %380 = vmatpush1.msra.mxu0 0.0
    %381 = vmatprep.mubr.f32.mxu0 0.0
    %382 = vmatmul.mubr.f32.gmra.mrb[0].mxu0 %v315
    %v383 = vpop.f32.mrb[0].mxu0
    %v384 = vadd.f32 0.0, %v383
    %v385 = vpop.f32.mrb[0].mxu0
    %386 = vdwg.mxu0
    %387 = vrot.lane.b32.xlu0 %v115, 64
    %v388 = vpop.permute.xlu0 %387
    %v391 = vsel %vm121, %v310, 0
    %393 = vmatprep.subr.mxu0 0.0
    %394 = vmatpush1.msra.mxu0 %v388
    %395 = vmatprep.subr.mxu0 0.0
    %396 = vmatpush1.msra.mxu0 0.0
    %397 = vmatprep.subr.mxu0 0.0
    %398 = vmatpush1.msra.mxu0 0.0
    %399 = vmatprep.subr.mxu0 0.0
    %400 = vmatpush1.msra.mxu0 0.0
    %401 = vmatprep.subr.mxu0 0.0
    %402 = vmatpush1.msra.mxu0 0.0
    %403 = vmatprep.subr.mxu0 0.0
    %404 = vmatpush1.msra.mxu0 0.0
    %405 = vmatprep.subr.mxu0 0.0
    %406 = vmatpush1.msra.mxu0 0.0
    %407 = vmatprep.subr.mxu0 0.0
    %408 = vmatpush1.msra.mxu0 0.0
    %409 = vmatprep.subr.mxu0 0.0
    %410 = vmatpush1.msra.mxu0 0.0
    %411 = vmatprep.subr.mxu0 0.0
    %412 = vmatpush1.msra.mxu0 0.0
    %413 = vmatprep.subr.mxu0 0.0
    %414 = vmatpush1.msra.mxu0 0.0
    %415 = vmatprep.subr.mxu0 0.0
    %416 = vmatpush1.msra.mxu0 0.0
    %417 = vmatprep.subr.mxu0 0.0
    %418 = vmatpush1.msra.mxu0 0.0
    %419 = vmatprep.subr.mxu0 0.0
    %420 = vmatpush1.msra.mxu0 0.0
    %421 = vmatprep.subr.mxu0 0.0
    %422 = vmatpush1.msra.mxu0 0.0
    %423 = vmatprep.subr.mxu0 0.0
    %424 = vmatpush1.msra.mxu0 0.0
    %425 = vmatprep.subr.mxu0 0.0
    %426 = vmatpush1.msra.mxu0 0.0
    %427 = vmatprep.subr.mxu0 0.0
    %428 = vmatpush1.msra.mxu0 0.0
    %429 = vmatprep.subr.mxu0 0.0
    %430 = vmatpush1.msra.mxu0 0.0
    %431 = vmatprep.subr.mxu0 0.0
    %432 = vmatpush1.msra.mxu0 0.0
    %433 = vmatprep.subr.mxu0 0.0
    %434 = vmatpush1.msra.mxu0 0.0
    %435 = vmatprep.subr.mxu0 0.0
    %436 = vmatpush1.msra.mxu0 0.0
    %437 = vmatprep.subr.mxu0 0.0
    %438 = vmatpush1.msra.mxu0 0.0
    %439 = vmatprep.subr.mxu0 0.0
    %440 = vmatpush1.msra.mxu0 0.0
    %441 = vmatprep.subr.mxu0 0.0
    %442 = vmatpush1.msra.mxu0 0.0
    %443 = vmatprep.subr.mxu0 0.0
    %444 = vmatpush1.msra.mxu0 0.0
    %445 = vmatprep.subr.mxu0 0.0
    %446 = vmatpush1.msra.mxu0 0.0
    %447 = vmatprep.subr.mxu0 0.0
    %448 = vmatpush1.msra.mxu0 0.0
    %449 = vmatprep.subr.mxu0 0.0
    %450 = vmatpush1.msra.mxu0 0.0
    %451 = vmatprep.subr.mxu0 0.0
    %452 = vmatpush1.msra.mxu0 0.0
    %453 = vmatprep.subr.mxu0 0.0
    %454 = vmatpush1.msra.mxu0 0.0
    %455 = vmatprep.subr.mxu0 0.0
    %456 = vmatpush1.msra.mxu0 0.0
    %457 = vmatprep.mubr.f32.mxu0 0.0
    %458 = vmatmul.mubr.f32.gmra.mrb[0].mxu0 %v391
    %v459 = vpop.f32.mrb[0].mxu0
    %v460 = vadd.f32 0.0, %v459
    %v461 = vpop.f32.mrb[0].mxu0
    %462 = vdwg.mxu0
    %463 = vrot.lane.b32.xlu0 %v110, 120
    %v464 = vpop.permute.xlu0 %463
    %465 = vrot.lane.b32.xlu0 %v110, 88
    %v466 = vpop.permute.xlu0 %465
    %v467 = vsel %vm121, %v464, 0
    %v469 = vsel %vm121, %v466, 0
    %471 = vmatprep.subr.mxu0 0.0
    %472 = vmatpush1.xpose.msra.mxu0 %v469
    %473 = vmatprep.subr.mxu0 0.0
    %474 = vmatpush1.xpose.msra.mxu0 0.0
    %475 = vmatprep.subr.mxu0 0.0
    %476 = vmatpush1.xpose.msra.mxu0 0.0
    %477 = vmatprep.subr.mxu0 0.0
    %478 = vmatpush1.xpose.msra.mxu0 0.0
    %479 = vmatprep.subr.mxu0 0.0
    %480 = vmatpush1.xpose.msra.mxu0 0.0
    %481 = vmatprep.subr.mxu0 0.0
    %482 = vmatpush1.xpose.msra.mxu0 0.0
    %483 = vmatprep.subr.mxu0 0.0
    %484 = vmatpush1.xpose.msra.mxu0 0.0
    %485 = vmatprep.subr.mxu0 0.0
    %486 = vmatpush1.xpose.msra.mxu0 0.0
    %487 = vmatprep.subr.mxu0 0.0
    %488 = vmatpush1.xpose.msra.mxu0 0.0
    %489 = vmatprep.subr.mxu0 0.0
    %490 = vmatpush1.xpose.msra.mxu0 0.0
    %491 = vmatprep.subr.mxu0 0.0
    %492 = vmatpush1.xpose.msra.mxu0 0.0
    %493 = vmatprep.subr.mxu0 0.0
    %494 = vmatpush1.xpose.msra.mxu0 0.0
    %495 = vmatprep.subr.mxu0 0.0
    %496 = vmatpush1.xpose.msra.mxu0 0.0
    %497 = vmatprep.subr.mxu0 0.0
    %498 = vmatpush1.xpose.msra.mxu0 0.0
    %499 = vmatprep.subr.mxu0 0.0
    %500 = vmatpush1.xpose.msra.mxu0 0.0
    %501 = vmatprep.subr.mxu0 0.0
    %502 = vmatpush1.xpose.msra.mxu0 0.0
    %503 = vmatprep.subr.mxu0 0.0
    %504 = vmatpush1.xpose.msra.mxu0 0.0
    %505 = vmatprep.subr.mxu0 0.0
    %506 = vmatpush1.xpose.msra.mxu0 0.0
    %507 = vmatprep.subr.mxu0 0.0
    %508 = vmatpush1.xpose.msra.mxu0 0.0
    %509 = vmatprep.subr.mxu0 0.0
    %510 = vmatpush1.xpose.msra.mxu0 0.0
    %511 = vmatprep.subr.mxu0 0.0
    %512 = vmatpush1.xpose.msra.mxu0 0.0
    %513 = vmatprep.subr.mxu0 0.0
    %514 = vmatpush1.xpose.msra.mxu0 0.0
    %515 = vmatprep.subr.mxu0 0.0
    %516 = vmatpush1.xpose.msra.mxu0 0.0
    %517 = vmatprep.subr.mxu0 0.0
    %518 = vmatpush1.xpose.msra.mxu0 0.0
    %519 = vmatprep.subr.mxu0 0.0
    %520 = vmatpush1.xpose.msra.mxu0 0.0
    %521 = vmatprep.subr.mxu0 0.0
    %522 = vmatpush1.xpose.msra.mxu0 0.0
    %523 = vmatprep.subr.mxu0 0.0
    %524 = vmatpush1.xpose.msra.mxu0 0.0
    %525 = vmatprep.subr.mxu0 0.0
    %526 = vmatpush1.xpose.msra.mxu0 0.0
    %527 = vmatprep.subr.mxu0 0.0
    %528 = vmatpush1.xpose.msra.mxu0 0.0
    %529 = vmatprep.subr.mxu0 0.0
    %530 = vmatpush1.xpose.msra.mxu0 0.0
    %531 = vmatprep.subr.mxu0 0.0
    %532 = vmatpush1.xpose.msra.mxu0 0.0
    %533 = vmatprep.subr.mxu0 0.0
    %534 = vmatpush1.xpose.msra.mxu0 0.0
    %535 = vmatprep.mubr.f32.mxu0 0.0
    %536 = vmatmul.mubr.f32.gmra.mrb[0].mxu0 %v467
    %v537 = vpop.f32.mrb[0].mxu0
    %v538 = vadd.f32 0.0, %v537
    %v539 = vpop.f32.mrb[0].mxu0
    %540 = vdwg.mxu0
    %541 = vrot.lane.b32.xlu0 %v115, 120
    %v542 = vpop.permute.xlu0 %541
    %543 = vrot.lane.b32.xlu0 %v115, 88
    %v544 = vpop.permute.xlu0 %543
    %v545 = vsel %vm121, %v542, 0
    %v547 = vsel %vm121, %v544, 0
    %549 = vmatprep.subr.mxu0 0.0
    %550 = vmatpush1.xpose.msra.mxu0 %v547
    %551 = vmatprep.subr.mxu0 0.0
    %552 = vmatpush1.xpose.msra.mxu0 0.0
    %553 = vmatprep.subr.mxu0 0.0
    %554 = vmatpush1.xpose.msra.mxu0 0.0
    %555 = vmatprep.subr.mxu0 0.0
    %556 = vmatpush1.xpose.msra.mxu0 0.0
    %557 = vmatprep.subr.mxu0 0.0
    %558 = vmatpush1.xpose.msra.mxu0 0.0
    %559 = vmatprep.subr.mxu0 0.0
    %560 = vmatpush1.xpose.msra.mxu0 0.0
    %561 = vmatprep.subr.mxu0 0.0
    %562 = vmatpush1.xpose.msra.mxu0 0.0
    %563 = vmatprep.subr.mxu0 0.0
    %564 = vmatpush1.xpose.msra.mxu0 0.0
    %565 = vmatprep.subr.mxu0 0.0
    %566 = vmatpush1.xpose.msra.mxu0 0.0
    %567 = vmatprep.subr.mxu0 0.0
    %568 = vmatpush1.xpose.msra.mxu0 0.0
    %569 = vmatprep.subr.mxu0 0.0
    %570 = vmatpush1.xpose.msra.mxu0 0.0
    %571 = vmatprep.subr.mxu0 0.0
    %572 = vmatpush1.xpose.msra.mxu0 0.0
    %573 = vmatprep.subr.mxu0 0.0
    %574 = vmatpush1.xpose.msra.mxu0 0.0
    %575 = vmatprep.subr.mxu0 0.0
    %576 = vmatpush1.xpose.msra.mxu0 0.0
    %577 = vmatprep.subr.mxu0 0.0
    %578 = vmatpush1.xpose.msra.mxu0 0.0
    %579 = vmatprep.subr.mxu0 0.0
    %580 = vmatpush1.xpose.msra.mxu0 0.0
    %581 = vmatprep.subr.mxu0 0.0
    %582 = vmatpush1.xpose.msra.mxu0 0.0
    %583 = vmatprep.subr.mxu0 0.0
    %584 = vmatpush1.xpose.msra.mxu0 0.0
    %585 = vmatprep.subr.mxu0 0.0
    %586 = vmatpush1.xpose.msra.mxu0 0.0
    %587 = vmatprep.subr.mxu0 0.0
    %588 = vmatpush1.xpose.msra.mxu0 0.0
    %589 = vmatprep.subr.mxu0 0.0
    %590 = vmatpush1.xpose.msra.mxu0 0.0
    %591 = vmatprep.subr.mxu0 0.0
    %592 = vmatpush1.xpose.msra.mxu0 0.0
    %593 = vmatprep.subr.mxu0 0.0
    %594 = vmatpush1.xpose.msra.mxu0 0.0
    %595 = vmatprep.subr.mxu0 0.0
    %596 = vmatpush1.xpose.msra.mxu0 0.0
    %597 = vmatprep.subr.mxu0 0.0
    %598 = vmatpush1.xpose.msra.mxu0 0.0
    %599 = vmatprep.subr.mxu0 0.0
    %600 = vmatpush1.xpose.msra.mxu0 0.0
    %601 = vmatprep.subr.mxu0 0.0
    %602 = vmatpush1.xpose.msra.mxu0 0.0
    %603 = vmatprep.subr.mxu0 0.0
    %604 = vmatpush1.xpose.msra.mxu0 0.0
    %605 = vmatprep.subr.mxu0 0.0
    %606 = vmatpush1.xpose.msra.mxu0 0.0
    %607 = vmatprep.subr.mxu0 0.0
    %608 = vmatpush1.xpose.msra.mxu0 0.0
    %609 = vmatprep.subr.mxu0 0.0
    %610 = vmatpush1.xpose.msra.mxu0 0.0
    %611 = vmatprep.subr.mxu0 0.0
    %612 = vmatpush1.xpose.msra.mxu0 0.0
    %613 = vmatprep.mubr.f32.mxu0 0.0
    %614 = vmatmul.mubr.f32.gmra.mrb[0].mxu0 %v545
    %v615 = vpop.f32.mrb[0].mxu0
    %v616 = vadd.f32 0.0, %v615
    %v617 = vpop.f32.mrb[0].mxu0
    %618 = vdwg.mxu0
    %v619 = vmul.f32 %v538, 0.35355338
    %v620 = vmul.f32 %v616, 0.35355338
    %v621 = vadd.f32 %v619, %v280
    %v622 = vadd.f32 %v620, %v284
    %v623 = vsel %vm121, %v621, -inf
    %624 = vmax.xlane.f32.xlu0 %v623
    %v625 = vpop.xlane.xlu0 %624
    %v626 = vsel %vm121, %v622, -inf
    %627 = vmax.xlane.f32.xlu0 %v626
    %v628 = vpop.xlane.xlu0 %627
    %v629 = vsub.f32 %v621, %v625
    %v630 = vsub.f32 %v622, %v628
    %v631 = vmul.f32 %v629, 1.442695
    %v632 = vpow.pop %v631
    %v633 = vmul.f32 %v630, 1.442695
    %v634 = vpow.pop %v633
    %v635 = vsel %vm121, %v632, 0.0
    %636 = vadd.xlane.f32.xlu0 %v635
    %v637 = vpop.xlane.xlu0 %636
    %v638 = vsel %vm121, %v634, 0.0
    %639 = vadd.xlane.f32.xlu0 %v638
    %v640 = vpop.xlane.xlu0 %639
    %v641 = vrcp.pop %v637
    %v642 = vmul.f32 %v632, %v641
    %v643 = vrcp.pop %v640
    %v644 = vmul.f32 %v634, %v643
    %645 = vrot.lane.b32.xlu0 %v110, 56
    %v646 = vpop.permute.xlu0 %645
    %v649 = vsel %vm121, %v642, 0
    %651 = vmatprep.subr.mxu0 0.0
    %652 = vmatpush1.msra.mxu0 %v646
    %653 = vmatprep.subr.mxu0 0.0
    %654 = vmatpush1.msra.mxu0 0.0
    %655 = vmatprep.subr.mxu0 0.0
    %656 = vmatpush1.msra.mxu0 0.0
    %657 = vmatprep.subr.mxu0 0.0
    %658 = vmatpush1.msra.mxu0 0.0
    %659 = vmatprep.subr.mxu0 0.0
    %660 = vmatpush1.msra.mxu0 0.0
    %661 = vmatprep.subr.mxu0 0.0
    %662 = vmatpush1.msra.mxu0 0.0
    %663 = vmatprep.subr.mxu0 0.0
    %664 = vmatpush1.msra.mxu0 0.0
    %665 = vmatprep.subr.mxu0 0.0
    %666 = vmatpush1.msra.mxu0 0.0
    %667 = vmatprep.subr.mxu0 0.0
    %668 = vmatpush1.msra.mxu0 0.0
    %669 = vmatprep.subr.mxu0 0.0
    %670 = vmatpush1.msra.mxu0 0.0
    %671 = vmatprep.subr.mxu0 0.0
    %672 = vmatpush1.msra.mxu0 0.0
    %673 = vmatprep.subr.mxu0 0.0
    %674 = vmatpush1.msra.mxu0 0.0
    %675 = vmatprep.subr.mxu0 0.0
    %676 = vmatpush1.msra.mxu0 0.0
    %677 = vmatprep.subr.mxu0 0.0
    %678 = vmatpush1.msra.mxu0 0.0
    %679 = vmatprep.subr.mxu0 0.0
    %680 = vmatpush1.msra.mxu0 0.0
    %681 = vmatprep.subr.mxu0 0.0
    %682 = vmatpush1.msra.mxu0 0.0
    %683 = vmatprep.subr.mxu0 0.0
    %684 = vmatpush1.msra.mxu0 0.0
    %685 = vmatprep.subr.mxu0 0.0
    %686 = vmatpush1.msra.mxu0 0.0
    %687 = vmatprep.subr.mxu0 0.0
    %688 = vmatpush1.msra.mxu0 0.0
    %689 = vmatprep.subr.mxu0 0.0
    %690 = vmatpush1.msra.mxu0 0.0
    %691 = vmatprep.subr.mxu0 0.0
    %692 = vmatpush1.msra.mxu0 0.0
    %693 = vmatprep.subr.mxu0 0.0
    %694 = vmatpush1.msra.mxu0 0.0
    %695 = vmatprep.subr.mxu0 0.0
    %696 = vmatpush1.msra.mxu0 0.0
    %697 = vmatprep.subr.mxu0 0.0
    %698 = vmatpush1.msra.mxu0 0.0
    %699 = vmatprep.subr.mxu0 0.0
    %700 = vmatpush1.msra.mxu0 0.0
    %701 = vmatprep.subr.mxu0 0.0
    %702 = vmatpush1.msra.mxu0 0.0
    %703 = vmatprep.subr.mxu0 0.0
    %704 = vmatpush1.msra.mxu0 0.0
    %705 = vmatprep.subr.mxu0 0.0
    %706 = vmatpush1.msra.mxu0 0.0
    %707 = vmatprep.subr.mxu0 0.0
    %708 = vmatpush1.msra.mxu0 0.0
    %709 = vmatprep.subr.mxu0 0.0
    %710 = vmatpush1.msra.mxu0 0.0
    %711 = vmatprep.subr.mxu0 0.0
    %712 = vmatpush1.msra.mxu0 0.0
    %713 = vmatprep.subr.mxu0 0.0
    %714 = vmatpush1.msra.mxu0 0.0
    %715 = vmatprep.mubr.f32.mxu0 0.0
    %716 = vmatmul.mubr.f32.gmra.mrb[0].mxu0 %v649
    %v717 = vpop.f32.mrb[0].mxu0
    %v718 = vadd.f32 0.0, %v717
    %v719 = vpop.f32.mrb[0].mxu0
    %720 = vdwg.mxu0
    %721 = vrot.lane.b32.xlu0 %v115, 56
    %v722 = vpop.permute.xlu0 %721
    %v725 = vsel %vm121, %v644, 0
    %727 = vmatprep.subr.mxu0 0.0
    %728 = vmatpush1.msra.mxu0 %v722
    %729 = vmatprep.subr.mxu0 0.0
    %730 = vmatpush1.msra.mxu0 0.0
    %731 = vmatprep.subr.mxu0 0.0
    %732 = vmatpush1.msra.mxu0 0.0
    %733 = vmatprep.subr.mxu0 0.0
    %734 = vmatpush1.msra.mxu0 0.0
    %735 = vmatprep.subr.mxu0 0.0
    %736 = vmatpush1.msra.mxu0 0.0
    %737 = vmatprep.subr.mxu0 0.0
    %738 = vmatpush1.msra.mxu0 0.0
    %739 = vmatprep.subr.mxu0 0.0
    %740 = vmatpush1.msra.mxu0 0.0
    %741 = vmatprep.subr.mxu0 0.0
    %742 = vmatpush1.msra.mxu0 0.0
    %743 = vmatprep.subr.mxu0 0.0
    %744 = vmatpush1.msra.mxu0 0.0
    %745 = vmatprep.subr.mxu0 0.0
    %746 = vmatpush1.msra.mxu0 0.0
    %747 = vmatprep.subr.mxu0 0.0
    %748 = vmatpush1.msra.mxu0 0.0
    %749 = vmatprep.subr.mxu0 0.0
    %750 = vmatpush1.msra.mxu0 0.0
    %751 = vmatprep.subr.mxu0 0.0
    %752 = vmatpush1.msra.mxu0 0.0
    %753 = vmatprep.subr.mxu0 0.0
    %754 = vmatpush1.msra.mxu0 0.0
    %755 = vmatprep.subr.mxu0 0.0
    %756 = vmatpush1.msra.mxu0 0.0
    %757 = vmatprep.subr.mxu0 0.0
    %758 = vmatpush1.msra.mxu0 0.0
    %759 = vmatprep.subr.mxu0 0.0
    %760 = vmatpush1.msra.mxu0 0.0
    %761 = vmatprep.subr.mxu0 0.0
    %762 = vmatpush1.msra.mxu0 0.0
    %763 = vmatprep.subr.mxu0 0.0
    %764 = vmatpush1.msra.mxu0 0.0
    %765 = vmatprep.subr.mxu0 0.0
    %766 = vmatpush1.msra.mxu0 0.0
    %767 = vmatprep.subr.mxu0 0.0
    %768 = vmatpush1.msra.mxu0 0.0
    %769 = vmatprep.subr.mxu0 0.0
    %770 = vmatpush1.msra.mxu0 0.0
    %771 = vmatprep.subr.mxu0 0.0
    %772 = vmatpush1.msra.mxu0 0.0
    %773 = vmatprep.subr.mxu0 0.0
    %774 = vmatpush1.msra.mxu0 0.0
    %775 = vmatprep.subr.mxu0 0.0
    %776 = vmatpush1.msra.mxu0 0.0
    %777 = vmatprep.subr.mxu0 0.0
    %778 = vmatpush1.msra.mxu0 0.0
    %779 = vmatprep.subr.mxu0 0.0
    %780 = vmatpush1.msra.mxu0 0.0
    %781 = vmatprep.subr.mxu0 0.0
    %782 = vmatpush1.msra.mxu0 0.0
    %783 = vmatprep.subr.mxu0 0.0
    %784 = vmatpush1.msra.mxu0 0.0
    %785 = vmatprep.subr.mxu0 0.0
    %786 = vmatpush1.msra.mxu0 0.0
    %787 = vmatprep.subr.mxu0 0.0
    %788 = vmatpush1.msra.mxu0 0.0
    %789 = vmatprep.subr.mxu0 0.0
    %790 = vmatpush1.msra.mxu0 0.0
    %791 = vmatprep.mubr.f32.mxu0 0.0
    %792 = vmatmul.mubr.f32.gmra.mrb[0].mxu0 %v725
    %v793 = vpop.f32.mrb[0].mxu0
    %v794 = vadd.f32 0.0, %v793
    %v795 = vpop.f32.mrb[0].mxu0
    %796 = vdwg.mxu0
    %797 = vrot.lane.b32.xlu0 %v110, 112
    %v798 = vpop.permute.xlu0 %797
    %799 = vrot.lane.b32.xlu0 %v110, 80
    %v800 = vpop.permute.xlu0 %799
    %v801 = vsel %vm121, %v798, 0
    %v803 = vsel %vm121, %v800, 0
    %805 = vmatprep.subr.mxu0 0.0
    %806 = vmatpush1.xpose.msra.mxu0 %v803
    %807 = vmatprep.subr.mxu0 0.0
    %808 = vmatpush1.xpose.msra.mxu0 0.0
    %809 = vmatprep.subr.mxu0 0.0
    %810 = vmatpush1.xpose.msra.mxu0 0.0
    %811 = vmatprep.subr.mxu0 0.0
    %812 = vmatpush1.xpose.msra.mxu0 0.0
    %813 = vmatprep.subr.mxu0 0.0
    %814 = vmatpush1.xpose.msra.mxu0 0.0
    %815 = vmatprep.subr.mxu0 0.0
    %816 = vmatpush1.xpose.msra.mxu0 0.0
    %817 = vmatprep.subr.mxu0 0.0
    %818 = vmatpush1.xpose.msra.mxu0 0.0
    %819 = vmatprep.subr.mxu0 0.0
    %820 = vmatpush1.xpose.msra.mxu0 0.0
    %821 = vmatprep.subr.mxu0 0.0
    %822 = vmatpush1.xpose.msra.mxu0 0.0
    %823 = vmatprep.subr.mxu0 0.0
    %824 = vmatpush1.xpose.msra.mxu0 0.0
    %825 = vmatprep.subr.mxu0 0.0
    %826 = vmatpush1.xpose.msra.mxu0 0.0
    %827 = vmatprep.subr.mxu0 0.0
    %828 = vmatpush1.xpose.msra.mxu0 0.0
    %829 = vmatprep.subr.mxu0 0.0
    %830 = vmatpush1.xpose.msra.mxu0 0.0
    %831 = vmatprep.subr.mxu0 0.0
    %832 = vmatpush1.xpose.msra.mxu0 0.0
    %833 = vmatprep.subr.mxu0 0.0
    %834 = vmatpush1.xpose.msra.mxu0 0.0
    %835 = vmatprep.subr.mxu0 0.0
    %836 = vmatpush1.xpose.msra.mxu0 0.0
    %837 = vmatprep.subr.mxu0 0.0
    %838 = vmatpush1.xpose.msra.mxu0 0.0
    %839 = vmatprep.subr.mxu0 0.0
    %840 = vmatpush1.xpose.msra.mxu0 0.0
    %841 = vmatprep.subr.mxu0 0.0
    %842 = vmatpush1.xpose.msra.mxu0 0.0
    %843 = vmatprep.subr.mxu0 0.0
    %844 = vmatpush1.xpose.msra.mxu0 0.0
    %845 = vmatprep.subr.mxu0 0.0
    %846 = vmatpush1.xpose.msra.mxu0 0.0
    %847 = vmatprep.subr.mxu0 0.0
    %848 = vmatpush1.xpose.msra.mxu0 0.0
    %849 = vmatprep.subr.mxu0 0.0
    %850 = vmatpush1.xpose.msra.mxu0 0.0
    %851 = vmatprep.subr.mxu0 0.0
    %852 = vmatpush1.xpose.msra.mxu0 0.0
    %853 = vmatprep.subr.mxu0 0.0
    %854 = vmatpush1.xpose.msra.mxu0 0.0
    %855 = vmatprep.subr.mxu0 0.0
    %856 = vmatpush1.xpose.msra.mxu0 0.0
    %857 = vmatprep.subr.mxu0 0.0
    %858 = vmatpush1.xpose.msra.mxu0 0.0
    %859 = vmatprep.subr.mxu0 0.0
    %860 = vmatpush1.xpose.msra.mxu0 0.0
    %861 = vmatprep.subr.mxu0 0.0
    %862 = vmatpush1.xpose.msra.mxu0 0.0
    %863 = vmatprep.subr.mxu0 0.0
    %864 = vmatpush1.xpose.msra.mxu0 0.0
    %865 = vmatprep.subr.mxu0 0.0
    %866 = vmatpush1.xpose.msra.mxu0 0.0
    %867 = vmatprep.subr.mxu0 0.0
    %868 = vmatpush1.xpose.msra.mxu0 0.0
    %869 = vmatprep.mubr.f32.mxu0 0.0
    %870 = vmatmul.mubr.f32.gmra.mrb[0].mxu0 %v801
    %v871 = vpop.f32.mrb[0].mxu0
    %v872 = vadd.f32 0.0, %v871
    %v873 = vpop.f32.mrb[0].mxu0
    %874 = vdwg.mxu0
    %875 = vrot.lane.b32.xlu0 %v115, 112
    %v876 = vpop.permute.xlu0 %875
    %877 = vrot.lane.b32.xlu0 %v115, 80
    %v878 = vpop.permute.xlu0 %877
    %v879 = vsel %vm121, %v876, 0
    %v881 = vsel %vm121, %v878, 0
    %883 = vmatprep.subr.mxu0 0.0
    %884 = vmatpush1.xpose.msra.mxu0 %v881
    %885 = vmatprep.subr.mxu0 0.0
    %886 = vmatpush1.xpose.msra.mxu0 0.0
    %887 = vmatprep.subr.mxu0 0.0
    %888 = vmatpush1.xpose.msra.mxu0 0.0
    %889 = vmatprep.subr.mxu0 0.0
    %890 = vmatpush1.xpose.msra.mxu0 0.0
    %891 = vmatprep.subr.mxu0 0.0
    %892 = vmatpush1.xpose.msra.mxu0 0.0
    %893 = vmatprep.subr.mxu0 0.0
    %894 = vmatpush1.xpose.msra.mxu0 0.0
    %895 = vmatprep.subr.mxu0 0.0
    %896 = vmatpush1.xpose.msra.mxu0 0.0
    %897 = vmatprep.subr.mxu0 0.0
    %898 = vmatpush1.xpose.msra.mxu0 0.0
    %899 = vmatprep.subr.mxu0 0.0
    %900 = vmatpush1.xpose.msra.mxu0 0.0
    %901 = vmatprep.subr.mxu0 0.0
    %902 = vmatpush1.xpose.msra.mxu0 0.0
    %903 = vmatprep.subr.mxu0 0.0
    %904 = vmatpush1.xpose.msra.mxu0 0.0
    %905 = vmatprep.subr.mxu0 0.0
    %906 = vmatpush1.xpose.msra.mxu0 0.0
    %907 = vmatprep.subr.mxu0 0.0
    %908 = vmatpush1.xpose.msra.mxu0 0.0
    %909 = vmatprep.subr.mxu0 0.0
    %910 = vmatpush1.xpose.msra.mxu0 0.0
    %911 = vmatprep.subr.mxu0 0.0
    %912 = vmatpush1.xpose.msra.mxu0 0.0
    %913 = vmatprep.subr.mxu0 0.0
    %914 = vmatpush1.xpose.msra.mxu0 0.0
    %915 = vmatprep.subr.mxu0 0.0
    %916 = vmatpush1.xpose.msra.mxu0 0.0
    %917 = vmatprep.subr.mxu0 0.0
    %918 = vmatpush1.xpose.msra.mxu0 0.0
    %919 = vmatprep.subr.mxu0 0.0
    %920 = vmatpush1.xpose.msra.mxu0 0.0
    %921 = vmatprep.subr.mxu0 0.0
    %922 = vmatpush1.xpose.msra.mxu0 0.0
    %923 = vmatprep.subr.mxu0 0.0
    %924 = vmatpush1.xpose.msra.mxu0 0.0
    %925 = vmatprep.subr.mxu0 0.0
    %926 = vmatpush1.xpose.msra.mxu0 0.0
    %927 = vmatprep.subr.mxu0 0.0
    %928 = vmatpush1.xpose.msra.mxu0 0.0
    %929 = vmatprep.subr.mxu0 0.0
    %930 = vmatpush1.xpose.msra.mxu0 0.0
    %931 = vmatprep.subr.mxu0 0.0
    %932 = vmatpush1.xpose.msra.mxu0 0.0
    %933 = vmatprep.subr.mxu0 0.0
    %934 = vmatpush1.xpose.msra.mxu0 0.0
    %935 = vmatprep.subr.mxu0 0.0
    %936 = vmatpush1.xpose.msra.mxu0 0.0
    %937 = vmatprep.subr.mxu0 0.0
    %938 = vmatpush1.xpose.msra.mxu0 0.0
    %939 = vmatprep.subr.mxu0 0.0
    %940 = vmatpush1.xpose.msra.mxu0 0.0
    %941 = vmatprep.subr.mxu0 0.0
    %942 = vmatpush1.xpose.msra.mxu0 0.0
    %943 = vmatprep.subr.mxu0 0.0
    %944 = vmatpush1.xpose.msra.mxu0 0.0
    %945 = vmatprep.subr.mxu0 0.0
    %946 = vmatpush1.xpose.msra.mxu0 0.0
    %947 = vmatprep.mubr.f32.mxu0 0.0
    %948 = vmatmul.mubr.f32.gmra.mrb[0].mxu0 %v879
    %v949 = vpop.f32.mrb[0].mxu0
    %v950 = vadd.f32 0.0, %v949
    %v951 = vpop.f32.mrb[0].mxu0
    %952 = vdwg.mxu0
    %v953 = vmul.f32 %v872, 0.35355338
    %v954 = vmul.f32 %v950, 0.35355338
    %v955 = vadd.f32 %v953, %v280
    %v956 = vadd.f32 %v954, %v284
    %v957 = vsel %vm121, %v955, -inf
    %958 = vmax.xlane.f32.xlu0 %v957
    %v959 = vpop.xlane.xlu0 %958
    %v960 = vsel %vm121, %v956, -inf
    %961 = vmax.xlane.f32.xlu0 %v960
    %v962 = vpop.xlane.xlu0 %961
    %v963 = vsub.f32 %v955, %v959
    %v964 = vsub.f32 %v956, %v962
    %v965 = vmul.f32 %v963, 1.442695
    %v966 = vpow.pop %v965
    %v967 = vmul.f32 %v964, 1.442695
    %v968 = vpow.pop %v967
    %v969 = vsel %vm121, %v966, 0.0
    %970 = vadd.xlane.f32.xlu0 %v969
    %v971 = vpop.xlane.xlu0 %970
    %v972 = vsel %vm121, %v968, 0.0
    %973 = vadd.xlane.f32.xlu0 %v972
    %v974 = vpop.xlane.xlu0 %973
    %v975 = vrcp.pop %v971
    %v976 = vmul.f32 %v966, %v975
    %v977 = vrcp.pop %v974
    %v978 = vmul.f32 %v968, %v977
    %979 = vrot.lane.b32.xlu0 %v110, 48
    %v980 = vpop.permute.xlu0 %979
    %v983 = vsel %vm121, %v976, 0
    %985 = vmatprep.subr.mxu0 0.0
    %986 = vmatpush1.msra.mxu0 %v980
    %987 = vmatprep.subr.mxu0 0.0
    %988 = vmatpush1.msra.mxu0 0.0
    %989 = vmatprep.subr.mxu0 0.0
    %990 = vmatpush1.msra.mxu0 0.0
    %991 = vmatprep.subr.mxu0 0.0
    %992 = vmatpush1.msra.mxu0 0.0
    %993 = vmatprep.subr.mxu0 0.0
    %994 = vmatpush1.msra.mxu0 0.0
    %995 = vmatprep.subr.mxu0 0.0
    %996 = vmatpush1.msra.mxu0 0.0
    %997 = vmatprep.subr.mxu0 0.0
    %998 = vmatpush1.msra.mxu0 0.0
    %999 = vmatprep.subr.mxu0 0.0
    %1000 = vmatpush1.msra.mxu0 0.0
    %1001 = vmatprep.subr.mxu0 0.0
    %1002 = vmatpush1.msra.mxu0 0.0
    %1003 = vmatprep.subr.mxu0 0.0
    %1004 = vmatpush1.msra.mxu0 0.0
    %1005 = vmatprep.subr.mxu0 0.0
    %1006 = vmatpush1.msra.mxu0 0.0
    %1007 = vmatprep.subr.mxu0 0.0
    %1008 = vmatpush1.msra.mxu0 0.0
    %1009 = vmatprep.subr.mxu0 0.0
    %1010 = vmatpush1.msra.mxu0 0.0
    %1011 = vmatprep.subr.mxu0 0.0
    %1012 = vmatpush1.msra.mxu0 0.0
    %1013 = vmatprep.subr.mxu0 0.0
    %1014 = vmatpush1.msra.mxu0 0.0
    %1015 = vmatprep.subr.mxu0 0.0
    %1016 = vmatpush1.msra.mxu0 0.0
    %1017 = vmatprep.subr.mxu0 0.0
    %1018 = vmatpush1.msra.mxu0 0.0
    %1019 = vmatprep.subr.mxu0 0.0
    %1020 = vmatpush1.msra.mxu0 0.0
    %1021 = vmatprep.subr.mxu0 0.0
    %1022 = vmatpush1.msra.mxu0 0.0
    %1023 = vmatprep.subr.mxu0 0.0
    %1024 = vmatpush1.msra.mxu0 0.0
    %1025 = vmatprep.subr.mxu0 0.0
    %1026 = vmatpush1.msra.mxu0 0.0
    %1027 = vmatprep.subr.mxu0 0.0
    %1028 = vmatpush1.msra.mxu0 0.0
    %1029 = vmatprep.subr.mxu0 0.0
    %1030 = vmatpush1.msra.mxu0 0.0
    %1031 = vmatprep.subr.mxu0 0.0
    %1032 = vmatpush1.msra.mxu0 0.0
    %1033 = vmatprep.subr.mxu0 0.0
    %1034 = vmatpush1.msra.mxu0 0.0
    %1035 = vmatprep.subr.mxu0 0.0
    %1036 = vmatpush1.msra.mxu0 0.0
    %1037 = vmatprep.subr.mxu0 0.0
    %1038 = vmatpush1.msra.mxu0 0.0
    %1039 = vmatprep.subr.mxu0 0.0
    %1040 = vmatpush1.msra.mxu0 0.0
    %1041 = vmatprep.subr.mxu0 0.0
    %1042 = vmatpush1.msra.mxu0 0.0
    %1043 = vmatprep.subr.mxu0 0.0
    %1044 = vmatpush1.msra.mxu0 0.0
    %1045 = vmatprep.subr.mxu0 0.0
    %1046 = vmatpush1.msra.mxu0 0.0
    %1047 = vmatprep.subr.mxu0 0.0
    %1048 = vmatpush1.msra.mxu0 0.0
    %1049 = vmatprep.mubr.f32.mxu0 0.0
    %1050 = vmatmul.mubr.f32.gmra.mrb[0].mxu0 %v983
    %v1051 = vpop.f32.mrb[0].mxu0
    %v1052 = vadd.f32 0.0, %v1051
    %v1053 = vpop.f32.mrb[0].mxu0
    %1054 = vdwg.mxu0
    %1055 = vrot.lane.b32.xlu0 %v115, 48
    %v1056 = vpop.permute.xlu0 %1055
    %v1059 = vsel %vm121, %v978, 0
    %1061 = vmatprep.subr.mxu0 0.0
    %1062 = vmatpush1.msra.mxu0 %v1056
    %1063 = vmatprep.subr.mxu0 0.0
    %1064 = vmatpush1.msra.mxu0 0.0
    %1065 = vmatprep.subr.mxu0 0.0
    %1066 = vmatpush1.msra.mxu0 0.0
    %1067 = vmatprep.subr.mxu0 0.0
    %1068 = vmatpush1.msra.mxu0 0.0
    %1069 = vmatprep.subr.mxu0 0.0
    %1070 = vmatpush1.msra.mxu0 0.0
    %1071 = vmatprep.subr.mxu0 0.0
    %1072 = vmatpush1.msra.mxu0 0.0
    %1073 = vmatprep.subr.mxu0 0.0
    %1074 = vmatpush1.msra.mxu0 0.0
    %1075 = vmatprep.subr.mxu0 0.0
    %1076 = vmatpush1.msra.mxu0 0.0
    %1077 = vmatprep.subr.mxu0 0.0
    %1078 = vmatpush1.msra.mxu0 0.0
    %1079 = vmatprep.subr.mxu0 0.0
    %1080 = vmatpush1.msra.mxu0 0.0
    %1081 = vmatprep.subr.mxu0 0.0
    %1082 = vmatpush1.msra.mxu0 0.0
    %1083 = vmatprep.subr.mxu0 0.0
    %1084 = vmatpush1.msra.mxu0 0.0
    %1085 = vmatprep.subr.mxu0 0.0
    %1086 = vmatpush1.msra.mxu0 0.0
    %1087 = vmatprep.subr.mxu0 0.0
    %1088 = vmatpush1.msra.mxu0 0.0
    %1089 = vmatprep.subr.mxu0 0.0
    %1090 = vmatpush1.msra.mxu0 0.0
    %1091 = vmatprep.subr.mxu0 0.0
    %1092 = vmatpush1.msra.mxu0 0.0
    %1093 = vmatprep.subr.mxu0 0.0
    %1094 = vmatpush1.msra.mxu0 0.0
    %1095 = vmatprep.subr.mxu0 0.0
    %1096 = vmatpush1.msra.mxu0 0.0
    %1097 = vmatprep.subr.mxu0 0.0
    %1098 = vmatpush1.msra.mxu0 0.0
    %1099 = vmatprep.subr.mxu0 0.0
    %1100 = vmatpush1.msra.mxu0 0.0
    %1101 = vmatprep.subr.mxu0 0.0
    %1102 = vmatpush1.msra.mxu0 0.0
    %1103 = vmatprep.subr.mxu0 0.0
    %1104 = vmatpush1.msra.mxu0 0.0
    %1105 = vmatprep.subr.mxu0 0.0
    %1106 = vmatpush1.msra.mxu0 0.0
    %1107 = vmatprep.subr.mxu0 0.0
    %1108 = vmatpush1.msra.mxu0 0.0
    %1109 = vmatprep.subr.mxu0 0.0
    %1110 = vmatpush1.msra.mxu0 0.0
    %1111 = vmatprep.subr.mxu0 0.0
    %1112 = vmatpush1.msra.mxu0 0.0
    %1113 = vmatprep.subr.mxu0 0.0
    %1114 = vmatpush1.msra.mxu0 0.0
    %1115 = vmatprep.subr.mxu0 0.0
    %1116 = vmatpush1.msra.mxu0 0.0
    %1117 = vmatprep.subr.mxu0 0.0
    %1118 = vmatpush1.msra.mxu0 0.0
    %1119 = vmatprep.subr.mxu0 0.0
    %1120 = vmatpush1.msra.mxu0 0.0
    %1121 = vmatprep.subr.mxu0 0.0
    %1122 = vmatpush1.msra.mxu0 0.0
    %1123 = vmatprep.subr.mxu0 0.0
    %1124 = vmatpush1.msra.mxu0 0.0
    %1125 = vmatprep.mubr.f32.mxu0 0.0
    %1126 = vmatmul.mubr.f32.gmra.mrb[0].mxu0 %v1059
    %v1127 = vpop.f32.mrb[0].mxu0
    %v1128 = vadd.f32 0.0, %v1127
    %v1129 = vpop.f32.mrb[0].mxu0
    %1130 = vdwg.mxu0
    %1131 = vrot.lane.b32.xlu0 %v110, 104
    %v1132 = vpop.permute.xlu0 %1131
    %1133 = vrot.lane.b32.xlu0 %v110, 72
    %v1134 = vpop.permute.xlu0 %1133
    %v1135 = vsel %vm121, %v1132, 0
    %v1137 = vsel %vm121, %v1134, 0
    %1139 = vmatprep.subr.mxu0 0.0
    %1140 = vmatpush1.xpose.msra.mxu0 %v1137
    %1141 = vmatprep.subr.mxu0 0.0
    %1142 = vmatpush1.xpose.msra.mxu0 0.0
    %1143 = vmatprep.subr.mxu0 0.0
    %1144 = vmatpush1.xpose.msra.mxu0 0.0
    %1145 = vmatprep.subr.mxu0 0.0
    %1146 = vmatpush1.xpose.msra.mxu0 0.0
    %1147 = vmatprep.subr.mxu0 0.0
    %1148 = vmatpush1.xpose.msra.mxu0 0.0
    %1149 = vmatprep.subr.mxu0 0.0
    %1150 = vmatpush1.xpose.msra.mxu0 0.0
    %1151 = vmatprep.subr.mxu0 0.0
    %1152 = vmatpush1.xpose.msra.mxu0 0.0
    %1153 = vmatprep.subr.mxu0 0.0
    %1154 = vmatpush1.xpose.msra.mxu0 0.0
    %1155 = vmatprep.subr.mxu0 0.0
    %1156 = vmatpush1.xpose.msra.mxu0 0.0
    %1157 = vmatprep.subr.mxu0 0.0
    %1158 = vmatpush1.xpose.msra.mxu0 0.0
    %1159 = vmatprep.subr.mxu0 0.0
    %1160 = vmatpush1.xpose.msra.mxu0 0.0
    %1161 = vmatprep.subr.mxu0 0.0
    %1162 = vmatpush1.xpose.msra.mxu0 0.0
    %1163 = vmatprep.subr.mxu0 0.0
    %1164 = vmatpush1.xpose.msra.mxu0 0.0
    %1165 = vmatprep.subr.mxu0 0.0
    %1166 = vmatpush1.xpose.msra.mxu0 0.0
    %1167 = vmatprep.subr.mxu0 0.0
    %1168 = vmatpush1.xpose.msra.mxu0 0.0
    %1169 = vmatprep.subr.mxu0 0.0
    %1170 = vmatpush1.xpose.msra.mxu0 0.0
    %1171 = vmatprep.subr.mxu0 0.0
    %1172 = vmatpush1.xpose.msra.mxu0 0.0
    %1173 = vmatprep.subr.mxu0 0.0
    %1174 = vmatpush1.xpose.msra.mxu0 0.0
    %1175 = vmatprep.subr.mxu0 0.0
    %1176 = vmatpush1.xpose.msra.mxu0 0.0
    %1177 = vmatprep.subr.mxu0 0.0
    %1178 = vmatpush1.xpose.msra.mxu0 0.0
    %1179 = vmatprep.subr.mxu0 0.0
    %1180 = vmatpush1.xpose.msra.mxu0 0.0
    %1181 = vmatprep.subr.mxu0 0.0
    %1182 = vmatpush1.xpose.msra.mxu0 0.0
    %1183 = vmatprep.subr.mxu0 0.0
    %1184 = vmatpush1.xpose.msra.mxu0 0.0
    %1185 = vmatprep.subr.mxu0 0.0
    %1186 = vmatpush1.xpose.msra.mxu0 0.0
    %1187 = vmatprep.subr.mxu0 0.0
    %1188 = vmatpush1.xpose.msra.mxu0 0.0
    %1189 = vmatprep.subr.mxu0 0.0
    %1190 = vmatpush1.xpose.msra.mxu0 0.0
    %1191 = vmatprep.subr.mxu0 0.0
    %1192 = vmatpush1.xpose.msra.mxu0 0.0
    %1193 = vmatprep.subr.mxu0 0.0
    %1194 = vmatpush1.xpose.msra.mxu0 0.0
    %1195 = vmatprep.subr.mxu0 0.0
    %1196 = vmatpush1.xpose.msra.mxu0 0.0
    %1197 = vmatprep.subr.mxu0 0.0
    %1198 = vmatpush1.xpose.msra.mxu0 0.0
    %1199 = vmatprep.subr.mxu0 0.0
    %1200 = vmatpush1.xpose.msra.mxu0 0.0
    %1201 = vmatprep.subr.mxu0 0.0
    %1202 = vmatpush1.xpose.msra.mxu0 0.0
    %1203 = vmatprep.mubr.f32.mxu0 0.0
    %1204 = vmatmul.mubr.f32.gmra.mrb[0].mxu0 %v1135
    %v1205 = vpop.f32.mrb[0].mxu0
    %v1206 = vadd.f32 0.0, %v1205
    %v1207 = vpop.f32.mrb[0].mxu0
    %1208 = vdwg.mxu0
    %1209 = vrot.lane.b32.xlu0 %v115, 104
    %v1210 = vpop.permute.xlu0 %1209
    %1211 = vrot.lane.b32.xlu0 %v115, 72
    %v1212 = vpop.permute.xlu0 %1211
    %v1213 = vsel %vm121, %v1210, 0
    %v1215 = vsel %vm121, %v1212, 0
    %1217 = vmatprep.subr.mxu0 0.0
    %1218 = vmatpush1.xpose.msra.mxu0 %v1215
    %1219 = vmatprep.subr.mxu0 0.0
    %1220 = vmatpush1.xpose.msra.mxu0 0.0
    %1221 = vmatprep.subr.mxu0 0.0
    %1222 = vmatpush1.xpose.msra.mxu0 0.0
    %1223 = vmatprep.subr.mxu0 0.0
    %1224 = vmatpush1.xpose.msra.mxu0 0.0
    %1225 = vmatprep.subr.mxu0 0.0
    %1226 = vmatpush1.xpose.msra.mxu0 0.0
    %1227 = vmatprep.subr.mxu0 0.0
    %1228 = vmatpush1.xpose.msra.mxu0 0.0
    %1229 = vmatprep.subr.mxu0 0.0
    %1230 = vmatpush1.xpose.msra.mxu0 0.0
    %1231 = vmatprep.subr.mxu0 0.0
    %1232 = vmatpush1.xpose.msra.mxu0 0.0
    %1233 = vmatprep.subr.mxu0 0.0
    %1234 = vmatpush1.xpose.msra.mxu0 0.0
    %1235 = vmatprep.subr.mxu0 0.0
    %1236 = vmatpush1.xpose.msra.mxu0 0.0
    %1237 = vmatprep.subr.mxu0 0.0
    %1238 = vmatpush1.xpose.msra.mxu0 0.0
    %1239 = vmatprep.subr.mxu0 0.0
    %1240 = vmatpush1.xpose.msra.mxu0 0.0
    %1241 = vmatprep.subr.mxu0 0.0
    %1242 = vmatpush1.xpose.msra.mxu0 0.0
    %1243 = vmatprep.subr.mxu0 0.0
    %1244 = vmatpush1.xpose.msra.mxu0 0.0
    %1245 = vmatprep.subr.mxu0 0.0
    %1246 = vmatpush1.xpose.msra.mxu0 0.0
    %1247 = vmatprep.subr.mxu0 0.0
    %1248 = vmatpush1.xpose.msra.mxu0 0.0
    %1249 = vmatprep.subr.mxu0 0.0
    %1250 = vmatpush1.xpose.msra.mxu0 0.0
    %1251 = vmatprep.subr.mxu0 0.0
    %1252 = vmatpush1.xpose.msra.mxu0 0.0
    %1253 = vmatprep.subr.mxu0 0.0
    %1254 = vmatpush1.xpose.msra.mxu0 0.0
    %1255 = vmatprep.subr.mxu0 0.0
    %1256 = vmatpush1.xpose.msra.mxu0 0.0
    %1257 = vmatprep.subr.mxu0 0.0
    %1258 = vmatpush1.xpose.msra.mxu0 0.0
    %1259 = vmatprep.subr.mxu0 0.0
    %1260 = vmatpush1.xpose.msra.mxu0 0.0
    %1261 = vmatprep.subr.mxu0 0.0
    %1262 = vmatpush1.xpose.msra.mxu0 0.0
    %1263 = vmatprep.subr.mxu0 0.0
    %1264 = vmatpush1.xpose.msra.mxu0 0.0
    %1265 = vmatprep.subr.mxu0 0.0
    %1266 = vmatpush1.xpose.msra.mxu0 0.0
    %1267 = vmatprep.subr.mxu0 0.0
    %1268 = vmatpush1.xpose.msra.mxu0 0.0
    %1269 = vmatprep.subr.mxu0 0.0
    %1270 = vmatpush1.xpose.msra.mxu0 0.0
    %1271 = vmatprep.subr.mxu0 0.0
    %1272 = vmatpush1.xpose.msra.mxu0 0.0
    %1273 = vmatprep.subr.mxu0 0.0
    %1274 = vmatpush1.xpose.msra.mxu0 0.0
    %1275 = vmatprep.subr.mxu0 0.0
    %1276 = vmatpush1.xpose.msra.mxu0 0.0
    %1277 = vmatprep.subr.mxu0 0.0
    %1278 = vmatpush1.xpose.msra.mxu0 0.0
    %1279 = vmatprep.subr.mxu0 0.0
    %1280 = vmatpush1.xpose.msra.mxu0 0.0
    %1281 = vmatprep.mubr.f32.mxu0 0.0
    %1282 = vmatmul.mubr.f32.gmra.mrb[0].mxu0 %v1213
    %v1283 = vpop.f32.mrb[0].mxu0
    %v1284 = vadd.f32 0.0, %v1283
    %v1285 = vpop.f32.mrb[0].mxu0
    %1286 = vdwg.mxu0
    %v1287 = vmul.f32 %v1206, 0.35355338
    %v1288 = vmul.f32 %v1284, 0.35355338
    %v1289 = vadd.f32 %v1287, %v280
    %v1290 = vadd.f32 %v1288, %v284
    %v1291 = vsel %vm121, %v1289, -inf
    %1292 = vmax.xlane.f32.xlu0 %v1291
    %v1293 = vpop.xlane.xlu0 %1292
    %v1294 = vsel %vm121, %v1290, -inf
    %1295 = vmax.xlane.f32.xlu0 %v1294
    %v1296 = vpop.xlane.xlu0 %1295
    %v1297 = vsub.f32 %v1289, %v1293
    %v1298 = vsub.f32 %v1290, %v1296
    %v1299 = vmul.f32 %v1297, 1.442695
    %v1300 = vpow.pop %v1299
    %v1301 = vmul.f32 %v1298, 1.442695
    %v1302 = vpow.pop %v1301
    %v1303 = vsel %vm121, %v1300, 0.0
    %1304 = vadd.xlane.f32.xlu0 %v1303
    %v1305 = vpop.xlane.xlu0 %1304
    %v1306 = vsel %vm121, %v1302, 0.0
    %1307 = vadd.xlane.f32.xlu0 %v1306
    %v1308 = vpop.xlane.xlu0 %1307
    %v1309 = vrcp.pop %v1305
    %v1310 = vmul.f32 %v1300, %v1309
    %v1311 = vrcp.pop %v1308
    %v1312 = vmul.f32 %v1302, %v1311
    %1313 = vrot.lane.b32.xlu0 %v110, 40
    %v1314 = vpop.permute.xlu0 %1313
    %v1317 = vsel %vm121, %v1310, 0
    %1319 = vmatprep.subr.mxu0 0.0
    %1320 = vmatpush1.msra.mxu0 %v1314
    %1321 = vmatprep.subr.mxu0 0.0
    %1322 = vmatpush1.msra.mxu0 0.0
    %1323 = vmatprep.subr.mxu0 0.0
    %1324 = vmatpush1.msra.mxu0 0.0
    %1325 = vmatprep.subr.mxu0 0.0
    %1326 = vmatpush1.msra.mxu0 0.0
    %1327 = vmatprep.subr.mxu0 0.0
    %1328 = vmatpush1.msra.mxu0 0.0
    %1329 = vmatprep.subr.mxu0 0.0
    %1330 = vmatpush1.msra.mxu0 0.0
    %1331 = vmatprep.subr.mxu0 0.0
    %1332 = vmatpush1.msra.mxu0 0.0
    %1333 = vmatprep.subr.mxu0 0.0
    %1334 = vmatpush1.msra.mxu0 0.0
    %1335 = vmatprep.subr.mxu0 0.0
    %1336 = vmatpush1.msra.mxu0 0.0
    %1337 = vmatprep.subr.mxu0 0.0
    %1338 = vmatpush1.msra.mxu0 0.0
    %1339 = vmatprep.subr.mxu0 0.0
    %1340 = vmatpush1.msra.mxu0 0.0
    %1341 = vmatprep.subr.mxu0 0.0
    %1342 = vmatpush1.msra.mxu0 0.0
    %1343 = vmatprep.subr.mxu0 0.0
    %1344 = vmatpush1.msra.mxu0 0.0
    %1345 = vmatprep.subr.mxu0 0.0
    %1346 = vmatpush1.msra.mxu0 0.0
    %1347 = vmatprep.subr.mxu0 0.0
    %1348 = vmatpush1.msra.mxu0 0.0
    %1349 = vmatprep.subr.mxu0 0.0
    %1350 = vmatpush1.msra.mxu0 0.0
    %1351 = vmatprep.subr.mxu0 0.0
    %1352 = vmatpush1.msra.mxu0 0.0
    %1353 = vmatprep.subr.mxu0 0.0
    %1354 = vmatpush1.msra.mxu0 0.0
    %1355 = vmatprep.subr.mxu0 0.0
    %1356 = vmatpush1.msra.mxu0 0.0
    %1357 = vmatprep.subr.mxu0 0.0
    %1358 = vmatpush1.msra.mxu0 0.0
    %1359 = vmatprep.subr.mxu0 0.0
    %1360 = vmatpush1.msra.mxu0 0.0
    %1361 = vmatprep.subr.mxu0 0.0
    %1362 = vmatpush1.msra.mxu0 0.0
    %1363 = vmatprep.subr.mxu0 0.0
    %1364 = vmatpush1.msra.mxu0 0.0
    %1365 = vmatprep.subr.mxu0 0.0
    %1366 = vmatpush1.msra.mxu0 0.0
    %1367 = vmatprep.subr.mxu0 0.0
    %1368 = vmatpush1.msra.mxu0 0.0
    %1369 = vmatprep.subr.mxu0 0.0
    %1370 = vmatpush1.msra.mxu0 0.0
    %1371 = vmatprep.subr.mxu0 0.0
    %1372 = vmatpush1.msra.mxu0 0.0
    %1373 = vmatprep.subr.mxu0 0.0
    %1374 = vmatpush1.msra.mxu0 0.0
    %1375 = vmatprep.subr.mxu0 0.0
    %1376 = vmatpush1.msra.mxu0 0.0
    %1377 = vmatprep.subr.mxu0 0.0
    %1378 = vmatpush1.msra.mxu0 0.0
    %1379 = vmatprep.subr.mxu0 0.0
    %1380 = vmatpush1.msra.mxu0 0.0
    %1381 = vmatprep.subr.mxu0 0.0
    %1382 = vmatpush1.msra.mxu0 0.0
    %1383 = vmatprep.mubr.f32.mxu0 0.0
    %1384 = vmatmul.mubr.f32.gmra.mrb[0].mxu0 %v1317
    %v1385 = vpop.f32.mrb[0].mxu0
    %v1386 = vadd.f32 0.0, %v1385
    %v1387 = vpop.f32.mrb[0].mxu0
    %1388 = vdwg.mxu0
    %1389 = vrot.lane.b32.xlu0 %v115, 40
    %v1390 = vpop.permute.xlu0 %1389
    %v1393 = vsel %vm121, %v1312, 0
    %1395 = vmatprep.subr.mxu0 0.0
    %1396 = vmatpush1.msra.mxu0 %v1390
    %1397 = vmatprep.subr.mxu0 0.0
    %1398 = vmatpush1.msra.mxu0 0.0
    %1399 = vmatprep.subr.mxu0 0.0
    %1400 = vmatpush1.msra.mxu0 0.0
    %1401 = vmatprep.subr.mxu0 0.0
    %1402 = vmatpush1.msra.mxu0 0.0
    %1403 = vmatprep.subr.mxu0 0.0
    %1404 = vmatpush1.msra.mxu0 0.0
    %1405 = vmatprep.subr.mxu0 0.0
    %1406 = vmatpush1.msra.mxu0 0.0
    %1407 = vmatprep.subr.mxu0 0.0
    %1408 = vmatpush1.msra.mxu0 0.0
    %1409 = vmatprep.subr.mxu0 0.0
    %1410 = vmatpush1.msra.mxu0 0.0
    %1411 = vmatprep.subr.mxu0 0.0
    %1412 = vmatpush1.msra.mxu0 0.0
    %1413 = vmatprep.subr.mxu0 0.0
    %1414 = vmatpush1.msra.mxu0 0.0
    %1415 = vmatprep.subr.mxu0 0.0
    %1416 = vmatpush1.msra.mxu0 0.0
    %1417 = vmatprep.subr.mxu0 0.0
    %1418 = vmatpush1.msra.mxu0 0.0
    %1419 = vmatprep.subr.mxu0 0.0
    %1420 = vmatpush1.msra.mxu0 0.0
    %1421 = vmatprep.subr.mxu0 0.0
    %1422 = vmatpush1.msra.mxu0 0.0
    %1423 = vmatprep.subr.mxu0 0.0
    %1424 = vmatpush1.msra.mxu0 0.0
    %1425 = vmatprep.subr.mxu0 0.0
    %1426 = vmatpush1.msra.mxu0 0.0
    %1427 = vmatprep.subr.mxu0 0.0
    %1428 = vmatpush1.msra.mxu0 0.0
    %1429 = vmatprep.subr.mxu0 0.0
    %1430 = vmatpush1.msra.mxu0 0.0
    %1431 = vmatprep.subr.mxu0 0.0
    %1432 = vmatpush1.msra.mxu0 0.0
    %1433 = vmatprep.subr.mxu0 0.0
    %1434 = vmatpush1.msra.mxu0 0.0
    %1435 = vmatprep.subr.mxu0 0.0
    %1436 = vmatpush1.msra.mxu0 0.0
    %1437 = vmatprep.subr.mxu0 0.0
    %1438 = vmatpush1.msra.mxu0 0.0
    %1439 = vmatprep.subr.mxu0 0.0
    %1440 = vmatpush1.msra.mxu0 0.0
    %1441 = vmatprep.subr.mxu0 0.0
    %1442 = vmatpush1.msra.mxu0 0.0
    %1443 = vmatprep.subr.mxu0 0.0
    %1444 = vmatpush1.msra.mxu0 0.0
    %1445 = vmatprep.subr.mxu0 0.0
    %1446 = vmatpush1.msra.mxu0 0.0
    %1447 = vmatprep.subr.mxu0 0.0
    %1448 = vmatpush1.msra.mxu0 0.0
    %1449 = vmatprep.subr.mxu0 0.0
    %1450 = vmatpush1.msra.mxu0 0.0
    %1451 = vmatprep.subr.mxu0 0.0
    %1452 = vmatpush1.msra.mxu0 0.0
    %1453 = vmatprep.subr.mxu0 0.0
    %1454 = vmatpush1.msra.mxu0 0.0
    %1455 = vmatprep.subr.mxu0 0.0
    %1456 = vmatpush1.msra.mxu0 0.0
    %1457 = vmatprep.subr.mxu0 0.0
    %1458 = vmatpush1.msra.mxu0 0.0
    %1459 = vmatprep.mubr.f32.mxu0 0.0
    %1460 = vmatmul.mubr.f32.gmra.mrb[0].mxu0 %v1393
    %v1461 = vpop.f32.mrb[0].mxu0
    %v1462 = vadd.f32 0.0, %v1461
    %v1463 = vpop.f32.mrb[0].mxu0
    %1464 = vdwg.mxu0
    %1467 = vrot.lane.b32.xlu0 %v718, 8
    %v1468 = vpop.permute.xlu0 %1467
    %1469 = vrot.lane.b32.xlu0 %v794, 8
    %v1470 = vpop.permute.xlu0 %1469
    %1475 = vrot.lane.b32.xlu0 %v1052, 16
    %v1476 = vpop.permute.xlu0 %1475
    %1477 = vrot.lane.b32.xlu0 %v1128, 16
    %v1478 = vpop.permute.xlu0 %1477
    %1483 = vrot.lane.b32.xlu0 %v1386, 24
    %v1484 = vpop.permute.xlu0 %1483
    %1485 = vrot.lane.b32.xlu0 %v1462, 24
    %v1486 = vpop.permute.xlu0 %1485
    %v1489 = vsel %vm121, %v384, %v1468
    %v1490 = vsel %vm121, %v460, %v1470
    %vm1491 = vcmask 130048
    %v1492 = vsel %vm1491, %v1489, %v1476
    %v1493 = vsel %vm1491, %v1490, %v1478
    %vm1494 = vcmask 195584
    %v1495 = vsel %vm1494, %v1492, %v1484
    %v1496 = vsel %vm1494, %v1493, %v1486
    %v1497 = vlaneseq
    %v1498 = vshrl.u32 %v1497, 7
    %v1499 = vsub.s32 0, %v1498
    %v1500 = vrot.slane %v31, %v1499
    %v1502 = vsel %vm36, %v1495, 0
    %v1505 = vsel %vm36, %v1496, 0
    %1507 = vmatprep.subr.mxu0 0.0
    %1508 = vmatpush1.msra.mxu0 %v27
    %1509 = vmatprep.subr.mxu0 0.0
    %1510 = vmatpush1.msra.mxu0 %v28
    %1511 = vmatprep.subr.mxu0 0.0
    %1512 = vmatpush1.msra.mxu0 %v29
    %1513 = vmatprep.subr.mxu0 0.0
    %1514 = vmatpush1.msra.mxu0 %v30
    %1515 = vmatprep.subr.mxu0 0.0
    %1516 = vmatpush1.msra.mxu0 0.0
    %1517 = vmatprep.subr.mxu0 0.0
    %1518 = vmatpush1.msra.mxu0 0.0
    %1519 = vmatprep.subr.mxu0 0.0
    %1520 = vmatpush1.msra.mxu0 0.0
    %1521 = vmatprep.subr.mxu0 0.0
    %1522 = vmatpush1.msra.mxu0 0.0
    %1523 = vmatprep.subr.mxu0 0.0
    %1524 = vmatpush1.msra.mxu0 0.0
    %1525 = vmatprep.subr.mxu0 0.0
    %1526 = vmatpush1.msra.mxu0 0.0
    %1527 = vmatprep.subr.mxu0 0.0
    %1528 = vmatpush1.msra.mxu0 0.0
    %1529 = vmatprep.subr.mxu0 0.0
    %1530 = vmatpush1.msra.mxu0 0.0
    %1531 = vmatprep.subr.mxu0 0.0
    %1532 = vmatpush1.msra.mxu0 0.0
    %1533 = vmatprep.subr.mxu0 0.0
    %1534 = vmatpush1.msra.mxu0 0.0
    %1535 = vmatprep.subr.mxu0 0.0
    %1536 = vmatpush1.msra.mxu0 0.0
    %1537 = vmatprep.subr.mxu0 0.0
    %1538 = vmatpush1.msra.mxu0 0.0
    %1539 = vmatprep.subr.mxu0 0.0
    %1540 = vmatpush1.msra.mxu0 0.0
    %1541 = vmatprep.subr.mxu0 0.0
    %1542 = vmatpush1.msra.mxu0 0.0
    %1543 = vmatprep.subr.mxu0 0.0
    %1544 = vmatpush1.msra.mxu0 0.0
    %1545 = vmatprep.subr.mxu0 0.0
    %1546 = vmatpush1.msra.mxu0 0.0
    %1547 = vmatprep.subr.mxu0 0.0
    %1548 = vmatpush1.msra.mxu0 0.0
    %1549 = vmatprep.subr.mxu0 0.0
    %1550 = vmatpush1.msra.mxu0 0.0
    %1551 = vmatprep.subr.mxu0 0.0
    %1552 = vmatpush1.msra.mxu0 0.0
    %1553 = vmatprep.subr.mxu0 0.0
    %1554 = vmatpush1.msra.mxu0 0.0
    %1555 = vmatprep.subr.mxu0 0.0
    %1556 = vmatpush1.msra.mxu0 0.0
    %1557 = vmatprep.subr.mxu0 0.0
    %1558 = vmatpush1.msra.mxu0 0.0
    %1559 = vmatprep.subr.mxu0 0.0
    %1560 = vmatpush1.msra.mxu0 0.0
    %1561 = vmatprep.subr.mxu0 0.0
    %1562 = vmatpush1.msra.mxu0 0.0
    %1563 = vmatprep.subr.mxu0 0.0
    %1564 = vmatpush1.msra.mxu0 0.0
    %1565 = vmatprep.subr.mxu0 0.0
    %1566 = vmatpush1.msra.mxu0 0.0
    %1567 = vmatprep.subr.mxu0 0.0
    %1568 = vmatpush1.msra.mxu0 0.0
    %1569 = vmatprep.subr.mxu0 0.0
    %1570 = vmatpush1.msra.mxu0 0.0
    %1571 = vmatprep.mubr.f32.mxu0 0.0
    %1572 = vmatmul.mubr.f32.gmra.mrb[0].mxu0 %v1502
    %v1573 = vpop.f32.mrb[0].mxu0
    %v1574 = vadd.f32 %v1500, %v1573
    %v1575 = vpop.f32.mrb[0].mxu0
    %1576 = vmatprep.mubr.f32.mxu0 0.0
    %1577 = vmatmul.mubr.f32.gmra.mrb[0].mxu0 %v1505
    %v1578 = vpop.f32.mrb[0].mxu0
    %v1579 = vadd.f32 %v1500, %v1578
    %v1580 = vpop.f32.mrb[0].mxu0
    %1581 = vdwg.mxu0
    %v1582 = vmax.f32 %v1574, 0.0
    %v1583 = vmax.f32 %v1579, 0.0
    %1584 = vst.msk [vmem:[#allocation2] sm:$0xff] %vm36, %v1582
    %1585 = vst.msk [vmem:[#allocation2 + $0x8] sm:$0xff] %vm36, %v1583
    // Predicated region
    $region18: #{tpu_custom_call.1} parent=1 // pred_check
      _
    $region19: #{tpu_custom_call.1} parent=1 // pred_check_branch
      %1587 = sbr.rel (0) target = $region21
    $region20: #{tpu_custom_call.1} parent=1 // pred_region
      %s1589 = ssub.s32 256, 256
      %1590 = vsyncadd [#allocation3], %s1589
      %s1591 = sshll.u32 [#allocation2], 4
      %s1592 = int_to_ptr.vmem [resolvable:$true] %s1591
      %1597 = dma.vmem_to_hbm [thread:$0]  %s1592, 256, %s4, [#allocation3], 128, 128, 8
    $region21: #{tpu_custom_call.1} parent=1 // pred_fallthru
      _
    // Predicated region
    $region22: #{tpu_custom_call.1} parent=1 // pred_check
      _
    $region23: #{tpu_custom_call.1} parent=1 // pred_check_branch
      %1599 = sbr.rel (0) target = $region25
    $region24: #{tpu_custom_call.1} parent=1 // pred_region
      %1600 = dma.done [#allocation3], 256
    $region25: #{tpu_custom_call.1} parent=1 // pred_fallthru
      _
    %1601 = vsyncpa [#allocation3], 1

</llo_original>
